<compile_context>
chip_gen: v7x
topology: tpu7x:2x2x1
jax: 0.10.0
libtpu: 0.0.40
codegen_flags: <defaults>
</compile_context>

<pallas_src>
import functools

import jax
import jax.numpy as jnp
import numpy as np
from jax import lax
from jax.experimental import pallas as pl
from jax.experimental.pallas import tpu as pltpu


def _round_up(x, m):
    return ((x + m - 1) // m) * m


# ----------------------------------------------------------------------------
# Fused Pallas kernel (one grid step = Bt batch elements)
# ----------------------------------------------------------------------------
def _fused_cell_kernel(xh_ref, c_ref, mask_ref, w1_ref, ba_ref, va_ref,
                       wx_ref, bg_ref, h_out_ref, c_out_ref,
                       *, k, cin_p, ch, width, bt, approx_softmax):
    hw = xh_ref.shape[2]
    pad = k // 2
    gemm_dtype = w1_ref.dtype
    # (dy, dx) -> flattened-HW shift; loop order must match pack_params().
    shifts = [(dy - pad) * width + (dx - pad) for dy in range(k) for dx in range(k)]

    def one_batch(b, carry):
        xh = xh_ref[b]                                        # [Cin_p+Ch_p, HW] f32

        # ---- in-VMEM im2col: masked lane rolls, 8-sublane-aligned blocks ----
        # block_j[r, pos] = mask_j[pos] * xh[r, pos + s_j]   (exact: wraps only
        # where mask_j == 0, i.e. SAME-padding zeros of the k x k conv).
        blocks = []
        for j, s in enumerate(shifts):
            rolled = xh if s == 0 else pltpu.roll(xh, shift=(-s) % hw, axis=1)
            m = mask_ref[pl.ds(j, 1), :]                      # [1, HW] f32
            blocks.append(rolled * m)
        p1 = jnp.concatenate(blocks, axis=0).astype(gemm_dtype)   # [Kf, HW]

        # ---- GEMM 1: [[Wa|Ua],[0|Wh]] @ patches ------------------------------
        pre = jnp.dot(w1_ref[...], p1,
                      preferred_element_type=jnp.float32)     # [5Ch, HW] f32
        z = jnp.tanh(pre[:ch, :] + ba_ref[...])               # attention pre-act
        gates_h = pre[ch:, :]                                 # Wh gate contribution

        # ---- attention logits (1x1 Va) + global spatial softmax --------------
        e = jnp.sum(z * va_ref[...], axis=0, keepdims=True)   # [1, HW]
        m_max = jnp.max(e, axis=1, keepdims=True)
        pexp = jnp.exp(e - m_max)
        denom = jnp.sum(pexp, axis=1, keepdims=True)
        a = pexp * pl.reciprocal(denom, approx=approx_softmax)  # [1, HW] f32

        # ---- attended-x patches: reuse masked x rows of GEMM1 blocks ---------
        # xtilde_patch_j = roll(a, s_j) * block_j[:Cin_p]  (f32 mul, then cast).
        xblocks = []
        for j, s in enumerate(shifts):
            ra = a if s == 0 else pltpu.roll(a, shift=(-s) % hw, axis=1)
            xblocks.append((ra * blocks[j][:cin_p, :]).astype(gemm_dtype))
        xpat = jnp.concatenate(xblocks, axis=0)               # [k*k*Cin_p, HW]

        # ---- GEMM 2 (small K) + gate fusion -----------------------------------
        gates = (jnp.dot(wx_ref[...], xpat, preferred_element_type=jnp.float32)
                 + gates_h + bg_ref[...])                      # [4Ch, HW] f32

        i_g = jax.nn.sigmoid(gates[0 * ch:1 * ch, :])
        f_g = jax.nn.sigmoid(gates[1 * ch:2 * ch, :])
        o_g = jax.nn.sigmoid(gates[2 * ch:3 * ch, :])
        g_g = jnp.tanh(gates[3 * ch:4 * ch, :])

        c_new = f_g * c_ref[b] + i_g * g_g
        h_out_ref[b] = (o_g * jnp.tanh(c_new)).astype(h_out_ref.dtype)
        c_out_ref[b] = c_new.astype(c_out_ref.dtype)
        return carry

    lax.fori_loop(0, bt, one_batch, 0, unroll=True)


# ----------------------------------------------------------------------------
# One-time parameter packing (hoist out of the per-timestep path)
# ----------------------------------------------------------------------------
def _pack_conv(w_oihw, cin_pad):
    """[Cout,Cin,k,k] -> [Cout, k*k, cin_pad]; column (dy*k+dx, c) = W[o,c,dy,dx]."""
    cout, cin, kh, kw = w_oihw.shape
    wt = jnp.transpose(w_oihw, (0, 2, 3, 1)).reshape(cout, kh * kw, cin)
    if cin_pad > cin:
        wt = jnp.pad(wt, ((0, 0), (0, 0), (0, cin_pad - cin)))
    return wt


def pack_params(params, k, height, width, compute="f32"):
    """Pack weights / masks once per sequence.  Returns a dict of device arrays."""
    f32 = jnp.float32
    gemm_dtype = jnp.bfloat16 if compute == "bf16" else f32
    wa, ua, wh, wx = (params["Wa"].astype(f32), params["Ua"].astype(f32),
                      params["Wh"].astype(f32), params["Wx"].astype(f32))
    ch, cin = wa.shape[0], wa.shape[1]
    cin_p, ch_p = _round_up(cin, 8), _round_up(ch, 8)
    kk = k * k

    wa_p = _pack_conv(wa, cin_p)                                # [Ch,  kk, Cin_p]
    ua_p = _pack_conv(ua, ch_p)                                 # [Ch,  kk, Ch_p]
    wh_p = _pack_conv(wh, ch_p)                                 # [4Ch, kk, Ch_p]
    wx_p = _pack_conv(wx, cin_p)                                # [4Ch, kk, Cin_p]

    # GEMM1 weight: rows [0:Ch] = [Wa | Ua], rows [Ch:5Ch] = [0 | Wh], per offset.
    w1_x = jnp.concatenate([wa_p, jnp.zeros((4 * ch, kk, cin_p), f32)], axis=0)
    w1_h = jnp.concatenate([ua_p, wh_p], axis=0)
    w1 = jnp.concatenate([w1_x, w1_h], axis=2).reshape(5 * ch, kk * (cin_p + ch_p))
    wx2 = wx_p.reshape(4 * ch, kk * cin_p)

    # Per-offset SAME-padding validity masks over the flattened HW axis.
    p = k // 2
    pos = jnp.arange(height * width)
    yy, xx = pos // width, pos % width
    rows = []
    for dy in range(k):
        for dx in range(k):
            yq, xq = yy + dy - p, xx + dx - p
            rows.append((yq >= 0) & (yq < height) & (xq >= 0) & (xq < width))
    mask = jnp.stack(rows).astype(f32)                          # [k*k, HW]

    return dict(
        w1=w1.astype(gemm_dtype), wx=wx2.astype(gemm_dtype), mask=mask,
        ba=params["ba"].reshape(ch, 1).astype(f32),
        va=params["Va"].reshape(ch, 1).astype(f32),
        bg=params["b"].reshape(4 * ch, 1).astype(f32))
    # vb (scalar logit bias) intentionally dropped: it cancels in the spatial softmax.


# ----------------------------------------------------------------------------
# Per-timestep cell
# ----------------------------------------------------------------------------
@functools.partial(jax.jit, static_argnames=("k", "batch_tile"))
def attentive_conv_lstm_cell(xt, state, packed, *, k, batch_tile=None):
    """xt: [B,Cin,H,W] NCHW, state=(h,c) each [B,Ch,H,W]. Returns (h', c') NCHW."""
    h, c = state
    b, cin, hh, ww = xt.shape
    ch = h.shape[1]
    hw = hh * ww
    f32 = jnp.float32
    kk = k * k
    cin_p = packed["wx"].shape[1] // kk
    ch_p = packed["w1"].shape[1] // kk - cin_p
    bf16_gemm = packed["w1"].dtype == jnp.bfloat16
    h_dtype = jnp.bfloat16 if bf16_gemm else f32

    # Raw channel rows only (im2col happens in-kernel): [B, Cin_p + Ch_p, HW] f32.
    parts = [xt.reshape(b, cin, hw).astype(f32)]
    if cin_p > cin:
        parts.append(jnp.zeros((b, cin_p - cin, hw), f32))
    parts.append(h.reshape(b, ch, hw).astype(f32))
    if ch_p > ch:
        parts.append(jnp.zeros((b, ch_p - ch, hw), f32))
    xh = jnp.concatenate(parts, axis=1)
    c_flat = c.reshape(b, ch, hw).astype(f32)

    # Batch tile: amortize per-grid-step overhead; prefer an even grid extent (v7x).
    if batch_tile is None:
        batch_tile = 1
        for cand in (8, 4, 2):
            if b % cand == 0 and (b // cand) % 2 == 0:
                batch_tile = cand
                break
    if b % batch_tile != 0:
        raise ValueError(f"batch {b} not divisible by batch_tile {batch_tile}")
    bt = batch_tile
    raw = cin_p + ch_p

    per_batch = lambda rows: pl.BlockSpec((bt, rows, hw), lambda i: (i, 0, 0))
    resident = lambda r, cdim: pl.BlockSpec((r, cdim), lambda i: (0, 0))

    kernel = functools.partial(
        _fused_cell_kernel, k=k, cin_p=cin_p, ch=ch, width=ww, bt=bt,
        approx_softmax=bf16_gemm)

    h_new, c_new = pl.pallas_call(
        kernel,
        out_shape=(jax.ShapeDtypeStruct((b, ch, hw), h_dtype),
                   jax.ShapeDtypeStruct((b, ch, hw), f32)),
        grid=(b // bt,),
        in_specs=[
            per_batch(raw),                    # raw x/h rows
            per_batch(ch),                     # c
            resident(kk, hw),                  # border masks
            resident(5 * ch, kk * raw),        # [[Wa|Ua],[0|Wh]]
            resident(ch, 1),                   # ba
            resident(ch, 1),                   # Va
            resident(4 * ch, kk * cin_p),      # Wx
            resident(4 * ch, 1),               # b
        ],
        out_specs=(per_batch(ch), per_batch(ch)),
        compiler_params=pltpu.CompilerParams(
            dimension_semantics=("parallel",)),
    )(xh, c_flat, packed["mask"], packed["w1"], packed["ba"], packed["va"],
      packed["wx"], packed["bg"])

    return (h_new.reshape(b, ch, hh, ww), c_new.reshape(b, ch, hh, ww))


# ----------------------------------------------------------------------------
# Pure-JAX reference (for correctness check)
# ----------------------------------------------------------------------------
def _conv(x, w, bias=None):
    out = lax.conv_general_dilated(
        x, w, window_strides=(1, 1), padding="SAME",
        dimension_numbers=("NCHW", "OIHW", "NCHW"),
        precision=lax.Precision.HIGHEST)
    if bias is not None:
        out = out + bias[None, :, None, None]
    return out


def ref_forward(xt, state, params):
    h, c = state
    z = jnp.tanh(_conv(xt, params["Wa"], params["ba"]) + _conv(h, params["Ua"]))
    e = _conv(z, params["Va"], params["vb"])                 # [B,1,H,W]
    b = e.shape[0]
    a = jax.nn.softmax(e.reshape(b, -1), axis=-1).reshape(e.shape)
    xtilde = a * xt
    gates = _conv(xtilde, params["Wx"], params["b"]) + _conv(h, params["Wh"])
    i, f, o, g = jnp.split(gates, 4, axis=1)
    c_new = jax.nn.sigmoid(f) * c + jax.nn.sigmoid(i) * jnp.tanh(g)
    h_new = jax.nn.sigmoid(o) * jnp.tanh(c_new)
    return h_new, c_new


# ----------------------------------------------------------------------------
if __name__ == "__main__":
    B, Cin, Ch, H, W, K = 4, 4, 8, 16, 16, 3
    key = jax.random.PRNGKey(0)
    ks = jax.random.split(key, 11)
    s = 0.1
    params = {
        "Wa": s * jax.random.normal(ks[0], (Ch, Cin, K, K), jnp.float32),
        "Ua": s * jax.random.normal(ks[1], (Ch, Ch, K, K), jnp.float32),
        "ba": s * jax.random.normal(ks[2], (Ch,), jnp.float32),
        "Va": s * jax.random.normal(ks[3], (1, Ch, 1, 1), jnp.float32),
        "vb": s * jax.random.normal(ks[4], (1,), jnp.float32),
        "Wx": s * jax.random.normal(ks[5], (4 * Ch, Cin, K, K), jnp.float32),
        "Wh": s * jax.random.normal(ks[6], (4 * Ch, Ch, K, K), jnp.float32),
        "b":  s * jax.random.normal(ks[7], (4 * Ch,), jnp.float32),
    }
    xt = jax.random.normal(ks[8], (B, Cin, H, W), jnp.float32)
    h0 = 0.5 * jax.random.normal(ks[9], (B, Ch, H, W), jnp.float32)
    c0 = 0.5 * jax.random.normal(ks[10], (B, Ch, H, W), jnp.float32)

    h_ref, c_ref = ref_forward(xt, (h0, c0), params)

    # f32 path, batch-tiled (Bt=2, grid=(2,))
    packed = pack_params(params, K, H, W, compute="f32")
    h1, c1 = attentive_conv_lstm_cell(xt, (h0, c0), packed, k=K)
    jax.block_until_ready((h1, c1))
    np.testing.assert_allclose(np.asarray(h1), np.asarray(h_ref), rtol=5e-3, atol=5e-3)
    np.testing.assert_allclose(np.asarray(c1), np.asarray(c_ref), rtol=5e-3, atol=5e-3)

    # f32 path, one element per step (even 4-step grid) — exercises Bt=1.
    h1b, c1b = attentive_conv_lstm_cell(xt, (h0, c0), packed, k=K, batch_tile=1)
    jax.block_until_ready((h1b, c1b))
    np.testing.assert_allclose(np.asarray(h1b), np.asarray(h_ref), rtol=5e-3, atol=5e-3)
    np.testing.assert_allclose(np.asarray(c1b), np.asarray(c_ref), rtol=5e-3, atol=5e-3)

    # bf16 MXU-input path; rolls / softmax / gates stay f32, h' emitted in bf16.
    packed_bf = pack_params(params, K, H, W, compute="bf16")
    h2, c2 = attentive_conv_lstm_cell(xt, (h0, c0), packed_bf, k=K)
    jax.block_until_ready((h2, c2))
    np.testing.assert_allclose(np.asarray(h2.astype(jnp.float32)), np.asarray(h_ref),
                               rtol=5e-2, atol=5e-2)
    np.testing.assert_allclose(np.asarray(c2), np.asarray(c_ref), rtol=5e-2, atol=5e-2)

    print("KERNEL_OK")
</pallas_src>

<mosaic_0001>
module attributes {stable_mosaic.version = 11 : i64} {
  func.func @_fused_cell_kernel(%arg0: i32, %arg1: memref<2x16x256xf32, #tpu.memory_space<vmem>>, %arg2: memref<2x8x256xf32, #tpu.memory_space<vmem>>, %arg3: memref<9x256xf32, #tpu.memory_space<vmem>>, %arg4: memref<40x144xf32, #tpu.memory_space<vmem>>, %arg5: memref<8x1xf32, #tpu.memory_space<vmem>>, %arg6: memref<8x1xf32, #tpu.memory_space<vmem>>, %arg7: memref<32x72xf32, #tpu.memory_space<vmem>>, %arg8: memref<32x1xf32, #tpu.memory_space<vmem>>, %arg9: memref<2x8x256xf32, #tpu.memory_space<vmem>>, %arg10: memref<2x8x256xf32, #tpu.memory_space<vmem>>) attributes {dimension_semantics = [#tpu.dimension_semantics<parallel>], iteration_bounds = array<i64: 2>, scalar_prefetch = 0 : i64, scratch_operands = 0 : i64, tpu.core_type = #tpu.core_type<tc>, window_params = [{transform_indices = @transform_0, window_bounds = array<i64: 2, 16, 256>}, {transform_indices = @transform_1, window_bounds = array<i64: 2, 8, 256>}, {pipeline_mode = #tpu.pipeline_mode<synchronous>, transform_indices = @transform_2, window_bounds = array<i64: 9, 256>}, {pipeline_mode = #tpu.pipeline_mode<synchronous>, transform_indices = @transform_3, window_bounds = array<i64: 40, 144>}, {pipeline_mode = #tpu.pipeline_mode<synchronous>, transform_indices = @transform_4, window_bounds = array<i64: 8, 1>}, {pipeline_mode = #tpu.pipeline_mode<synchronous>, transform_indices = @transform_5, window_bounds = array<i64: 8, 1>}, {pipeline_mode = #tpu.pipeline_mode<synchronous>, transform_indices = @transform_6, window_bounds = array<i64: 32, 72>}, {pipeline_mode = #tpu.pipeline_mode<synchronous>, transform_indices = @transform_7, window_bounds = array<i64: 32, 1>}, {transform_indices = @transform_8, window_bounds = array<i64: 2, 8, 256>}, {transform_indices = @transform_9, window_bounds = array<i64: 2, 8, 256>}]} {
    %c0_i32 = arith.constant 0 : i32
    %0 = arith.index_cast %c0_i32 : i32 to index
    %c0 = arith.constant 0 : index
    %c0_0 = arith.constant 0 : index
    %1 = vector.load %arg1[%0, %c0, %c0_0] : memref<2x16x256xf32, #tpu.memory_space<vmem>>, vector<1x16x256xf32>
    %2 = vector.shape_cast %1 : vector<1x16x256xf32> to vector<16x256xf32>
    %c17_i32 = arith.constant 17 : i32
    %3 = tpu.dynamic_rotate %2 by %c17_i32 dim 1 : vector<16x256xf32>, i32 -> vector<16x256xf32>
    %c0_1 = arith.constant 0 : index
    %c0_2 = arith.constant 0 : index
    %4 = vector.load %arg3[%c0_1, %c0_2] : memref<9x256xf32, #tpu.memory_space<vmem>>, vector<1x256xf32>
    %5 = vector.broadcast %4 : vector<1x256xf32> to vector<16x256xf32>
    %6 = arith.mulf %3, %5 : vector<16x256xf32>
    %c16_i32 = arith.constant 16 : i32
    %7 = tpu.dynamic_rotate %2 by %c16_i32 dim 1 : vector<16x256xf32>, i32 -> vector<16x256xf32>
    %c1 = arith.constant 1 : index
    %c0_3 = arith.constant 0 : index
    %8 = vector.load %arg3[%c1, %c0_3] : memref<9x256xf32, #tpu.memory_space<vmem>>, vector<1x256xf32>
    %9 = vector.broadcast %8 : vector<1x256xf32> to vector<16x256xf32>
    %10 = arith.mulf %7, %9 : vector<16x256xf32>
    %c15_i32 = arith.constant 15 : i32
    %11 = tpu.dynamic_rotate %2 by %c15_i32 dim 1 : vector<16x256xf32>, i32 -> vector<16x256xf32>
    %c2 = arith.constant 2 : index
    %c0_4 = arith.constant 0 : index
    %12 = vector.load %arg3[%c2, %c0_4] : memref<9x256xf32, #tpu.memory_space<vmem>>, vector<1x256xf32>
    %13 = vector.broadcast %12 : vector<1x256xf32> to vector<16x256xf32>
    %14 = arith.mulf %11, %13 : vector<16x256xf32>
    %c1_i32 = arith.constant 1 : i32
    %15 = tpu.dynamic_rotate %2 by %c1_i32 dim 1 : vector<16x256xf32>, i32 -> vector<16x256xf32>
    %c3 = arith.constant 3 : index
    %c0_5 = arith.constant 0 : index
    %16 = vector.load %arg3[%c3, %c0_5] : memref<9x256xf32, #tpu.memory_space<vmem>>, vector<1x256xf32>
    %17 = vector.broadcast %16 : vector<1x256xf32> to vector<16x256xf32>
    %18 = arith.mulf %15, %17 : vector<16x256xf32>
    %c4 = arith.constant 4 : index
    %c0_6 = arith.constant 0 : index
    %19 = vector.load %arg3[%c4, %c0_6] : memref<9x256xf32, #tpu.memory_space<vmem>>, vector<1x256xf32>
    %20 = vector.broadcast %19 : vector<1x256xf32> to vector<16x256xf32>
    %21 = arith.mulf %2, %20 : vector<16x256xf32>
    %c255_i32 = arith.constant 255 : i32
    %22 = tpu.dynamic_rotate %2 by %c255_i32 dim 1 : vector<16x256xf32>, i32 -> vector<16x256xf32>
    %c5 = arith.constant 5 : index
    %c0_7 = arith.constant 0 : index
    %23 = vector.load %arg3[%c5, %c0_7] : memref<9x256xf32, #tpu.memory_space<vmem>>, vector<1x256xf32>
    %24 = vector.broadcast %23 : vector<1x256xf32> to vector<16x256xf32>
    %25 = arith.mulf %22, %24 : vector<16x256xf32>
    %c241_i32 = arith.constant 241 : i32
    %26 = tpu.dynamic_rotate %2 by %c241_i32 dim 1 : vector<16x256xf32>, i32 -> vector<16x256xf32>
    %c6 = arith.constant 6 : index
    %c0_8 = arith.constant 0 : index
    %27 = vector.load %arg3[%c6, %c0_8] : memref<9x256xf32, #tpu.memory_space<vmem>>, vector<1x256xf32>
    %28 = vector.broadcast %27 : vector<1x256xf32> to vector<16x256xf32>
    %29 = arith.mulf %26, %28 : vector<16x256xf32>
    %c240_i32 = arith.constant 240 : i32
    %30 = tpu.dynamic_rotate %2 by %c240_i32 dim 1 : vector<16x256xf32>, i32 -> vector<16x256xf32>
    %c7 = arith.constant 7 : index
    %c0_9 = arith.constant 0 : index
    %31 = vector.load %arg3[%c7, %c0_9] : memref<9x256xf32, #tpu.memory_space<vmem>>, vector<1x256xf32>
    %32 = vector.broadcast %31 : vector<1x256xf32> to vector<16x256xf32>
    %33 = arith.mulf %30, %32 : vector<16x256xf32>
    %c239_i32 = arith.constant 239 : i32
    %34 = tpu.dynamic_rotate %2 by %c239_i32 dim 1 : vector<16x256xf32>, i32 -> vector<16x256xf32>
    %c8 = arith.constant 8 : index
    %c0_10 = arith.constant 0 : index
    %35 = vector.load %arg3[%c8, %c0_10] : memref<9x256xf32, #tpu.memory_space<vmem>>, vector<1x256xf32>
    %36 = vector.broadcast %35 : vector<1x256xf32> to vector<16x256xf32>
    %37 = arith.mulf %34, %36 : vector<16x256xf32>
    %38 = tpu.concatenate %6, %10, %14, %18, %21, %25, %29, %33, %37 in 0 : vector<16x256xf32>, vector<16x256xf32>, vector<16x256xf32>, vector<16x256xf32>, vector<16x256xf32>, vector<16x256xf32>, vector<16x256xf32>, vector<16x256xf32>, vector<16x256xf32> -> vector<144x256xf32>
    %c0_11 = arith.constant 0 : index
    %c0_12 = arith.constant 0 : index
    %39 = vector.load %arg4[%c0_11, %c0_12] : memref<40x144xf32, #tpu.memory_space<vmem>>, vector<40x144xf32>
    %cst = arith.constant dense<0.000000e+00> : vector<40x256xf32>
    %40 = tpu.matmul %39, %38, %cst {dimension_numbers = #tpu.dot_dimension_numbers<[1], [0], [0], [1], [0, 0, 1, 1], [], []>} : vector<40x144xf32>, vector<144x256xf32>, vector<40x256xf32> -> vector<40x256xf32>
    %41 = vector.extract_strided_slice %40 {offsets = [0, 0], sizes = [8, 256], strides = [1, 1]} : vector<40x256xf32> to vector<8x256xf32>
    %c0_13 = arith.constant 0 : index
    %c0_14 = arith.constant 0 : index
    %42 = vector.load %arg5[%c0_13, %c0_14] : memref<8x1xf32, #tpu.memory_space<vmem>>, vector<8x1xf32>
    %43 = vector.broadcast %42 : vector<8x1xf32> to vector<8x256xf32>
    %44 = arith.addf %41, %43 : vector<8x256xf32>
    %45 = math.tanh %44 : vector<8x256xf32>
    %46 = vector.extract_strided_slice %40 {offsets = [8, 0], sizes = [32, 256], strides = [1, 1]} : vector<40x256xf32> to vector<32x256xf32>
    %c0_15 = arith.constant 0 : index
    %c0_16 = arith.constant 0 : index
    %47 = vector.load %arg6[%c0_15, %c0_16] : memref<8x1xf32, #tpu.memory_space<vmem>>, vector<8x1xf32>
    %48 = vector.broadcast %47 : vector<8x1xf32> to vector<8x256xf32>
    %49 = arith.mulf %45, %48 : vector<8x256xf32>
    %cst_17 = arith.constant dense<0.000000e+00> : vector<256xf32>
    %50 = vector.multi_reduction <add>, %49, %cst_17 [0] : vector<8x256xf32> to vector<256xf32>
    %51 = vector.shape_cast %50 : vector<256xf32> to vector<1x256xf32>
    %cst_18 = arith.constant dense<0xFF800000> : vector<1xf32>
    %52 = vector.multi_reduction <maximumf>, %51, %cst_18 [1] : vector<1x256xf32> to vector<1xf32>
    %53 = vector.shape_cast %52 : vector<1xf32> to vector<1x1xf32>
    %54 = vector.broadcast %53 : vector<1x1xf32> to vector<1x256xf32>
    %55 = arith.subf %51, %54 : vector<1x256xf32>
    %56 = math.exp %55 : vector<1x256xf32>
    %cst_19 = arith.constant dense<0.000000e+00> : vector<1xf32>
    %57 = vector.multi_reduction <add>, %56, %cst_19 [1] : vector<1x256xf32> to vector<1xf32>
    %58 = vector.shape_cast %57 : vector<1xf32> to vector<1x1xf32>
    %59 = tpu.reciprocal %58 : vector<1x1xf32> -> vector<1x1xf32>
    %60 = vector.broadcast %59 : vector<1x1xf32> to vector<1x256xf32>
    %61 = arith.mulf %56, %60 : vector<1x256xf32>
    %c17_i32_20 = arith.constant 17 : i32
    %62 = tpu.dynamic_rotate %61 by %c17_i32_20 dim 1 : vector<1x256xf32>, i32 -> vector<1x256xf32>
    %63 = vector.extract_strided_slice %6 {offsets = [0, 0], sizes = [8, 256], strides = [1, 1]} : vector<16x256xf32> to vector<8x256xf32>
    %64 = vector.broadcast %62 : vector<1x256xf32> to vector<8x256xf32>
    %65 = arith.mulf %64, %63 : vector<8x256xf32>
    %c16_i32_21 = arith.constant 16 : i32
    %66 = tpu.dynamic_rotate %61 by %c16_i32_21 dim 1 : vector<1x256xf32>, i32 -> vector<1x256xf32>
    %67 = vector.extract_strided_slice %10 {offsets = [0, 0], sizes = [8, 256], strides = [1, 1]} : vector<16x256xf32> to vector<8x256xf32>
    %68 = vector.broadcast %66 : vector<1x256xf32> to vector<8x256xf32>
    %69 = arith.mulf %68, %67 : vector<8x256xf32>
    %c15_i32_22 = arith.constant 15 : i32
    %70 = tpu.dynamic_rotate %61 by %c15_i32_22 dim 1 : vector<1x256xf32>, i32 -> vector<1x256xf32>
    %71 = vector.extract_strided_slice %14 {offsets = [0, 0], sizes = [8, 256], strides = [1, 1]} : vector<16x256xf32> to vector<8x256xf32>
    %72 = vector.broadcast %70 : vector<1x256xf32> to vector<8x256xf32>
    %73 = arith.mulf %72, %71 : vector<8x256xf32>
    %c1_i32_23 = arith.constant 1 : i32
    %74 = tpu.dynamic_rotate %61 by %c1_i32_23 dim 1 : vector<1x256xf32>, i32 -> vector<1x256xf32>
    %75 = vector.extract_strided_slice %18 {offsets = [0, 0], sizes = [8, 256], strides = [1, 1]} : vector<16x256xf32> to vector<8x256xf32>
    %76 = vector.broadcast %74 : vector<1x256xf32> to vector<8x256xf32>
    %77 = arith.mulf %76, %75 : vector<8x256xf32>
    %78 = vector.extract_strided_slice %21 {offsets = [0, 0], sizes = [8, 256], strides = [1, 1]} : vector<16x256xf32> to vector<8x256xf32>
    %79 = vector.broadcast %61 : vector<1x256xf32> to vector<8x256xf32>
    %80 = arith.mulf %79, %78 : vector<8x256xf32>
    %c255_i32_24 = arith.constant 255 : i32
    %81 = tpu.dynamic_rotate %61 by %c255_i32_24 dim 1 : vector<1x256xf32>, i32 -> vector<1x256xf32>
    %82 = vector.extract_strided_slice %25 {offsets = [0, 0], sizes = [8, 256], strides = [1, 1]} : vector<16x256xf32> to vector<8x256xf32>
    %83 = vector.broadcast %81 : vector<1x256xf32> to vector<8x256xf32>
    %84 = arith.mulf %83, %82 : vector<8x256xf32>
    %c241_i32_25 = arith.constant 241 : i32
    %85 = tpu.dynamic_rotate %61 by %c241_i32_25 dim 1 : vector<1x256xf32>, i32 -> vector<1x256xf32>
    %86 = vector.extract_strided_slice %29 {offsets = [0, 0], sizes = [8, 256], strides = [1, 1]} : vector<16x256xf32> to vector<8x256xf32>
    %87 = vector.broadcast %85 : vector<1x256xf32> to vector<8x256xf32>
    %88 = arith.mulf %87, %86 : vector<8x256xf32>
    %c240_i32_26 = arith.constant 240 : i32
    %89 = tpu.dynamic_rotate %61 by %c240_i32_26 dim 1 : vector<1x256xf32>, i32 -> vector<1x256xf32>
    %90 = vector.extract_strided_slice %33 {offsets = [0, 0], sizes = [8, 256], strides = [1, 1]} : vector<16x256xf32> to vector<8x256xf32>
    %91 = vector.broadcast %89 : vector<1x256xf32> to vector<8x256xf32>
    %92 = arith.mulf %91, %90 : vector<8x256xf32>
    %c239_i32_27 = arith.constant 239 : i32
    %93 = tpu.dynamic_rotate %61 by %c239_i32_27 dim 1 : vector<1x256xf32>, i32 -> vector<1x256xf32>
    %94 = vector.extract_strided_slice %37 {offsets = [0, 0], sizes = [8, 256], strides = [1, 1]} : vector<16x256xf32> to vector<8x256xf32>
    %95 = vector.broadcast %93 : vector<1x256xf32> to vector<8x256xf32>
    %96 = arith.mulf %95, %94 : vector<8x256xf32>
    %97 = tpu.concatenate %65, %69, %73, %77, %80, %84, %88, %92, %96 in 0 : vector<8x256xf32>, vector<8x256xf32>, vector<8x256xf32>, vector<8x256xf32>, vector<8x256xf32>, vector<8x256xf32>, vector<8x256xf32>, vector<8x256xf32>, vector<8x256xf32> -> vector<72x256xf32>
    %c0_28 = arith.constant 0 : index
    %c0_29 = arith.constant 0 : index
    %98 = vector.load %arg7[%c0_28, %c0_29] : memref<32x72xf32, #tpu.memory_space<vmem>>, vector<32x72xf32>
    %cst_30 = arith.constant dense<0.000000e+00> : vector<32x256xf32>
    %99 = tpu.matmul %98, %97, %cst_30 {dimension_numbers = #tpu.dot_dimension_numbers<[1], [0], [0], [1], [0, 0, 1, 1], [], []>} : vector<32x72xf32>, vector<72x256xf32>, vector<32x256xf32> -> vector<32x256xf32>
    %100 = arith.addf %99, %46 : vector<32x256xf32>
    %c0_31 = arith.constant 0 : index
    %c0_32 = arith.constant 0 : index
    %101 = vector.load %arg8[%c0_31, %c0_32] : memref<32x1xf32, #tpu.memory_space<vmem>>, vector<32x1xf32>
    %102 = vector.broadcast %101 : vector<32x1xf32> to vector<32x256xf32>
    %103 = arith.addf %100, %102 : vector<32x256xf32>
    %104 = vector.extract_strided_slice %103 {offsets = [0, 0], sizes = [8, 256], strides = [1, 1]} : vector<32x256xf32> to vector<8x256xf32>
    %105 = arith.negf %104 : vector<8x256xf32>
    %106 = math.exp %105 : vector<8x256xf32>
    %cst_33 = arith.constant 1.000000e+00 : f32
    %107 = vector.broadcast %cst_33 : f32 to vector<8x256xf32>
    %108 = arith.addf %107, %106 : vector<8x256xf32>
    %109 = arith.divf %107, %108 : vector<8x256xf32>
    %110 = vector.extract_strided_slice %103 {offsets = [8, 0], sizes = [8, 256], strides = [1, 1]} : vector<32x256xf32> to vector<8x256xf32>
    %111 = arith.negf %110 : vector<8x256xf32>
    %112 = math.exp %111 : vector<8x256xf32>
    %cst_34 = arith.constant 1.000000e+00 : f32
    %113 = vector.broadcast %cst_34 : f32 to vector<8x256xf32>
    %114 = arith.addf %113, %112 : vector<8x256xf32>
    %115 = arith.divf %113, %114 : vector<8x256xf32>
    %116 = vector.extract_strided_slice %103 {offsets = [16, 0], sizes = [8, 256], strides = [1, 1]} : vector<32x256xf32> to vector<8x256xf32>
    %117 = arith.negf %116 : vector<8x256xf32>
    %118 = math.exp %117 : vector<8x256xf32>
    %cst_35 = arith.constant 1.000000e+00 : f32
    %119 = vector.broadcast %cst_35 : f32 to vector<8x256xf32>
    %120 = arith.addf %119, %118 : vector<8x256xf32>
    %121 = arith.divf %119, %120 : vector<8x256xf32>
    %122 = vector.extract_strided_slice %103 {offsets = [24, 0], sizes = [8, 256], strides = [1, 1]} : vector<32x256xf32> to vector<8x256xf32>
    %123 = math.tanh %122 : vector<8x256xf32>
    %124 = arith.index_cast %c0_i32 : i32 to index
    %c0_36 = arith.constant 0 : index
    %c0_37 = arith.constant 0 : index
    %125 = vector.load %arg2[%124, %c0_36, %c0_37] : memref<2x8x256xf32, #tpu.memory_space<vmem>>, vector<1x8x256xf32>
    %126 = vector.shape_cast %125 : vector<1x8x256xf32> to vector<8x256xf32>
    %127 = arith.mulf %115, %126 : vector<8x256xf32>
    %128 = arith.mulf %109, %123 : vector<8x256xf32>
    %129 = arith.addf %127, %128 : vector<8x256xf32>
    %130 = math.tanh %129 : vector<8x256xf32>
    %131 = arith.mulf %121, %130 : vector<8x256xf32>
    %132 = arith.index_cast %c0_i32 : i32 to index
    %c0_38 = arith.constant 0 : index
    %c0_39 = arith.constant 0 : index
    %133 = vector.load %arg9[%132, %c0_38, %c0_39] : memref<2x8x256xf32, #tpu.memory_space<vmem>>, vector<1x8x256xf32>
    %134 = vector.shape_cast %133 : vector<1x8x256xf32> to vector<8x256xf32>
    %135 = vector.shape_cast %131 : vector<8x256xf32> to vector<1x8x256xf32>
    tpu.vector_store %arg9[%132, %c0_38, %c0_39], %135 {strides = array<i32>} : memref<2x8x256xf32, #tpu.memory_space<vmem>>, vector<1x8x256xf32>,
    %136 = arith.index_cast %c0_i32 : i32 to index
    %c0_40 = arith.constant 0 : index
    %c0_41 = arith.constant 0 : index
    %137 = vector.load %arg10[%136, %c0_40, %c0_41] : memref<2x8x256xf32, #tpu.memory_space<vmem>>, vector<1x8x256xf32>
    %138 = vector.shape_cast %137 : vector<1x8x256xf32> to vector<8x256xf32>
    %139 = vector.shape_cast %129 : vector<8x256xf32> to vector<1x8x256xf32>
    tpu.vector_store %arg10[%136, %c0_40, %c0_41], %139 {strides = array<i32>} : memref<2x8x256xf32, #tpu.memory_space<vmem>>, vector<1x8x256xf32>,
    %c1_i32_42 = arith.constant 1 : i32
    %140 = arith.index_cast %c1_i32_42 : i32 to index
    %c0_43 = arith.constant 0 : index
    %c0_44 = arith.constant 0 : index
    %141 = vector.load %arg1[%140, %c0_43, %c0_44] : memref<2x16x256xf32, #tpu.memory_space<vmem>>, vector<1x16x256xf32>
    %142 = vector.shape_cast %141 : vector<1x16x256xf32> to vector<16x256xf32>
    %c17_i32_45 = arith.constant 17 : i32
    %143 = tpu.dynamic_rotate %142 by %c17_i32_45 dim 1 : vector<16x256xf32>, i32 -> vector<16x256xf32>
    %c0_46 = arith.constant 0 : index
    %c0_47 = arith.constant 0 : index
    %144 = vector.load %arg3[%c0_46, %c0_47] : memref<9x256xf32, #tpu.memory_space<vmem>>, vector<1x256xf32>
    %145 = vector.broadcast %144 : vector<1x256xf32> to vector<16x256xf32>
    %146 = arith.mulf %143, %145 : vector<16x256xf32>
    %c16_i32_48 = arith.constant 16 : i32
    %147 = tpu.dynamic_rotate %142 by %c16_i32_48 dim 1 : vector<16x256xf32>, i32 -> vector<16x256xf32>
    %c1_49 = arith.constant 1 : index
    %c0_50 = arith.constant 0 : index
    %148 = vector.load %arg3[%c1_49, %c0_50] : memref<9x256xf32, #tpu.memory_space<vmem>>, vector<1x256xf32>
    %149 = vector.broadcast %148 : vector<1x256xf32> to vector<16x256xf32>
    %150 = arith.mulf %147, %149 : vector<16x256xf32>
    %c15_i32_51 = arith.constant 15 : i32
    %151 = tpu.dynamic_rotate %142 by %c15_i32_51 dim 1 : vector<16x256xf32>, i32 -> vector<16x256xf32>
    %c2_52 = arith.constant 2 : index
    %c0_53 = arith.constant 0 : index
    %152 = vector.load %arg3[%c2_52, %c0_53] : memref<9x256xf32, #tpu.memory_space<vmem>>, vector<1x256xf32>
    %153 = vector.broadcast %152 : vector<1x256xf32> to vector<16x256xf32>
    %154 = arith.mulf %151, %153 : vector<16x256xf32>
    %c1_i32_54 = arith.constant 1 : i32
    %155 = tpu.dynamic_rotate %142 by %c1_i32_54 dim 1 : vector<16x256xf32>, i32 -> vector<16x256xf32>
    %c3_55 = arith.constant 3 : index
    %c0_56 = arith.constant 0 : index
    %156 = vector.load %arg3[%c3_55, %c0_56] : memref<9x256xf32, #tpu.memory_space<vmem>>, vector<1x256xf32>
    %157 = vector.broadcast %156 : vector<1x256xf32> to vector<16x256xf32>
    %158 = arith.mulf %155, %157 : vector<16x256xf32>
    %c4_57 = arith.constant 4 : index
    %c0_58 = arith.constant 0 : index
    %159 = vector.load %arg3[%c4_57, %c0_58] : memref<9x256xf32, #tpu.memory_space<vmem>>, vector<1x256xf32>
    %160 = vector.broadcast %159 : vector<1x256xf32> to vector<16x256xf32>
    %161 = arith.mulf %142, %160 : vector<16x256xf32>
    %c255_i32_59 = arith.constant 255 : i32
    %162 = tpu.dynamic_rotate %142 by %c255_i32_59 dim 1 : vector<16x256xf32>, i32 -> vector<16x256xf32>
    %c5_60 = arith.constant 5 : index
    %c0_61 = arith.constant 0 : index
    %163 = vector.load %arg3[%c5_60, %c0_61] : memref<9x256xf32, #tpu.memory_space<vmem>>, vector<1x256xf32>
    %164 = vector.broadcast %163 : vector<1x256xf32> to vector<16x256xf32>
    %165 = arith.mulf %162, %164 : vector<16x256xf32>
    %c241_i32_62 = arith.constant 241 : i32
    %166 = tpu.dynamic_rotate %142 by %c241_i32_62 dim 1 : vector<16x256xf32>, i32 -> vector<16x256xf32>
    %c6_63 = arith.constant 6 : index
    %c0_64 = arith.constant 0 : index
    %167 = vector.load %arg3[%c6_63, %c0_64] : memref<9x256xf32, #tpu.memory_space<vmem>>, vector<1x256xf32>
    %168 = vector.broadcast %167 : vector<1x256xf32> to vector<16x256xf32>
    %169 = arith.mulf %166, %168 : vector<16x256xf32>
    %c240_i32_65 = arith.constant 240 : i32
    %170 = tpu.dynamic_rotate %142 by %c240_i32_65 dim 1 : vector<16x256xf32>, i32 -> vector<16x256xf32>
    %c7_66 = arith.constant 7 : index
    %c0_67 = arith.constant 0 : index
    %171 = vector.load %arg3[%c7_66, %c0_67] : memref<9x256xf32, #tpu.memory_space<vmem>>, vector<1x256xf32>
    %172 = vector.broadcast %171 : vector<1x256xf32> to vector<16x256xf32>
    %173 = arith.mulf %170, %172 : vector<16x256xf32>
    %c239_i32_68 = arith.constant 239 : i32
    %174 = tpu.dynamic_rotate %142 by %c239_i32_68 dim 1 : vector<16x256xf32>, i32 -> vector<16x256xf32>
    %c8_69 = arith.constant 8 : index
    %c0_70 = arith.constant 0 : index
    %175 = vector.load %arg3[%c8_69, %c0_70] : memref<9x256xf32, #tpu.memory_space<vmem>>, vector<1x256xf32>
    %176 = vector.broadcast %175 : vector<1x256xf32> to vector<16x256xf32>
    %177 = arith.mulf %174, %176 : vector<16x256xf32>
    %178 = tpu.concatenate %146, %150, %154, %158, %161, %165, %169, %173, %177 in 0 : vector<16x256xf32>, vector<16x256xf32>, vector<16x256xf32>, vector<16x256xf32>, vector<16x256xf32>, vector<16x256xf32>, vector<16x256xf32>, vector<16x256xf32>, vector<16x256xf32> -> vector<144x256xf32>
    %c0_71 = arith.constant 0 : index
    %c0_72 = arith.constant 0 : index
    %179 = vector.load %arg4[%c0_71, %c0_72] : memref<40x144xf32, #tpu.memory_space<vmem>>, vector<40x144xf32>
    %cst_73 = arith.constant dense<0.000000e+00> : vector<40x256xf32>
    %180 = tpu.matmul %179, %178, %cst_73 {dimension_numbers = #tpu.dot_dimension_numbers<[1], [0], [0], [1], [0, 0, 1, 1], [], []>} : vector<40x144xf32>, vector<144x256xf32>, vector<40x256xf32> -> vector<40x256xf32>
    %181 = vector.extract_strided_slice %180 {offsets = [0, 0], sizes = [8, 256], strides = [1, 1]} : vector<40x256xf32> to vector<8x256xf32>
    %c0_74 = arith.constant 0 : index
    %c0_75 = arith.constant 0 : index
    %182 = vector.load %arg5[%c0_74, %c0_75] : memref<8x1xf32, #tpu.memory_space<vmem>>, vector<8x1xf32>
    %183 = vector.broadcast %182 : vector<8x1xf32> to vector<8x256xf32>
    %184 = arith.addf %181, %183 : vector<8x256xf32>
    %185 = math.tanh %184 : vector<8x256xf32>
    %186 = vector.extract_strided_slice %180 {offsets = [8, 0], sizes = [32, 256], strides = [1, 1]} : vector<40x256xf32> to vector<32x256xf32>
    %c0_76 = arith.constant 0 : index
    %c0_77 = arith.constant 0 : index
    %187 = vector.load %arg6[%c0_76, %c0_77] : memref<8x1xf32, #tpu.memory_space<vmem>>, vector<8x1xf32>
    %188 = vector.broadcast %187 : vector<8x1xf32> to vector<8x256xf32>
    %189 = arith.mulf %185, %188 : vector<8x256xf32>
    %cst_78 = arith.constant dense<0.000000e+00> : vector<256xf32>
    %190 = vector.multi_reduction <add>, %189, %cst_78 [0] : vector<8x256xf32> to vector<256xf32>
    %191 = vector.shape_cast %190 : vector<256xf32> to vector<1x256xf32>
    %cst_79 = arith.constant dense<0xFF800000> : vector<1xf32>
    %192 = vector.multi_reduction <maximumf>, %191, %cst_79 [1] : vector<1x256xf32> to vector<1xf32>
    %193 = vector.shape_cast %192 : vector<1xf32> to vector<1x1xf32>
    %194 = vector.broadcast %193 : vector<1x1xf32> to vector<1x256xf32>
    %195 = arith.subf %191, %194 : vector<1x256xf32>
    %196 = math.exp %195 : vector<1x256xf32>
    %cst_80 = arith.constant dense<0.000000e+00> : vector<1xf32>
    %197 = vector.multi_reduction <add>, %196, %cst_80 [1] : vector<1x256xf32> to vector<1xf32>
    %198 = vector.shape_cast %197 : vector<1xf32> to vector<1x1xf32>
    %199 = tpu.reciprocal %198 : vector<1x1xf32> -> vector<1x1xf32>
    %200 = vector.broadcast %199 : vector<1x1xf32> to vector<1x256xf32>
    %201 = arith.mulf %196, %200 : vector<1x256xf32>
    %c17_i32_81 = arith.constant 17 : i32
    %202 = tpu.dynamic_rotate %201 by %c17_i32_81 dim 1 : vector<1x256xf32>, i32 -> vector<1x256xf32>
    %203 = vector.extract_strided_slice %146 {offsets = [0, 0], sizes = [8, 256], strides = [1, 1]} : vector<16x256xf32> to vector<8x256xf32>
    %204 = vector.broadcast %202 : vector<1x256xf32> to vector<8x256xf32>
    %205 = arith.mulf %204, %203 : vector<8x256xf32>
    %c16_i32_82 = arith.constant 16 : i32
    %206 = tpu.dynamic_rotate %201 by %c16_i32_82 dim 1 : vector<1x256xf32>, i32 -> vector<1x256xf32>
    %207 = vector.extract_strided_slice %150 {offsets = [0, 0], sizes = [8, 256], strides = [1, 1]} : vector<16x256xf32> to vector<8x256xf32>
    %208 = vector.broadcast %206 : vector<1x256xf32> to vector<8x256xf32>
    %209 = arith.mulf %208, %207 : vector<8x256xf32>
    %c15_i32_83 = arith.constant 15 : i32
    %210 = tpu.dynamic_rotate %201 by %c15_i32_83 dim 1 : vector<1x256xf32>, i32 -> vector<1x256xf32>
    %211 = vector.extract_strided_slice %154 {offsets = [0, 0], sizes = [8, 256], strides = [1, 1]} : vector<16x256xf32> to vector<8x256xf32>
    %212 = vector.broadcast %210 : vector<1x256xf32> to vector<8x256xf32>
    %213 = arith.mulf %212, %211 : vector<8x256xf32>
    %c1_i32_84 = arith.constant 1 : i32
    %214 = tpu.dynamic_rotate %201 by %c1_i32_84 dim 1 : vector<1x256xf32>, i32 -> vector<1x256xf32>
    %215 = vector.extract_strided_slice %158 {offsets = [0, 0], sizes = [8, 256], strides = [1, 1]} : vector<16x256xf32> to vector<8x256xf32>
    %216 = vector.broadcast %214 : vector<1x256xf32> to vector<8x256xf32>
    %217 = arith.mulf %216, %215 : vector<8x256xf32>
    %218 = vector.extract_strided_slice %161 {offsets = [0, 0], sizes = [8, 256], strides = [1, 1]} : vector<16x256xf32> to vector<8x256xf32>
    %219 = vector.broadcast %201 : vector<1x256xf32> to vector<8x256xf32>
    %220 = arith.mulf %219, %218 : vector<8x256xf32>
    %c255_i32_85 = arith.constant 255 : i32
    %221 = tpu.dynamic_rotate %201 by %c255_i32_85 dim 1 : vector<1x256xf32>, i32 -> vector<1x256xf32>
    %222 = vector.extract_strided_slice %165 {offsets = [0, 0], sizes = [8, 256], strides = [1, 1]} : vector<16x256xf32> to vector<8x256xf32>
    %223 = vector.broadcast %221 : vector<1x256xf32> to vector<8x256xf32>
    %224 = arith.mulf %223, %222 : vector<8x256xf32>
    %c241_i32_86 = arith.constant 241 : i32
    %225 = tpu.dynamic_rotate %201 by %c241_i32_86 dim 1 : vector<1x256xf32>, i32 -> vector<1x256xf32>
    %226 = vector.extract_strided_slice %169 {offsets = [0, 0], sizes = [8, 256], strides = [1, 1]} : vector<16x256xf32> to vector<8x256xf32>
    %227 = vector.broadcast %225 : vector<1x256xf32> to vector<8x256xf32>
    %228 = arith.mulf %227, %226 : vector<8x256xf32>
    %c240_i32_87 = arith.constant 240 : i32
    %229 = tpu.dynamic_rotate %201 by %c240_i32_87 dim 1 : vector<1x256xf32>, i32 -> vector<1x256xf32>
    %230 = vector.extract_strided_slice %173 {offsets = [0, 0], sizes = [8, 256], strides = [1, 1]} : vector<16x256xf32> to vector<8x256xf32>
    %231 = vector.broadcast %229 : vector<1x256xf32> to vector<8x256xf32>
    %232 = arith.mulf %231, %230 : vector<8x256xf32>
    %c239_i32_88 = arith.constant 239 : i32
    %233 = tpu.dynamic_rotate %201 by %c239_i32_88 dim 1 : vector<1x256xf32>, i32 -> vector<1x256xf32>
    %234 = vector.extract_strided_slice %177 {offsets = [0, 0], sizes = [8, 256], strides = [1, 1]} : vector<16x256xf32> to vector<8x256xf32>
    %235 = vector.broadcast %233 : vector<1x256xf32> to vector<8x256xf32>
    %236 = arith.mulf %235, %234 : vector<8x256xf32>
    %237 = tpu.concatenate %205, %209, %213, %217, %220, %224, %228, %232, %236 in 0 : vector<8x256xf32>, vector<8x256xf32>, vector<8x256xf32>, vector<8x256xf32>, vector<8x256xf32>, vector<8x256xf32>, vector<8x256xf32>, vector<8x256xf32>, vector<8x256xf32> -> vector<72x256xf32>
    %c0_89 = arith.constant 0 : index
    %c0_90 = arith.constant 0 : index
    %238 = vector.load %arg7[%c0_89, %c0_90] : memref<32x72xf32, #tpu.memory_space<vmem>>, vector<32x72xf32>
    %cst_91 = arith.constant dense<0.000000e+00> : vector<32x256xf32>
    %239 = tpu.matmul %238, %237, %cst_91 {dimension_numbers = #tpu.dot_dimension_numbers<[1], [0], [0], [1], [0, 0, 1, 1], [], []>} : vector<32x72xf32>, vector<72x256xf32>, vector<32x256xf32> -> vector<32x256xf32>
    %240 = arith.addf %239, %186 : vector<32x256xf32>
    %c0_92 = arith.constant 0 : index
    %c0_93 = arith.constant 0 : index
    %241 = vector.load %arg8[%c0_92, %c0_93] : memref<32x1xf32, #tpu.memory_space<vmem>>, vector<32x1xf32>
    %242 = vector.broadcast %241 : vector<32x1xf32> to vector<32x256xf32>
    %243 = arith.addf %240, %242 : vector<32x256xf32>
    %244 = vector.extract_strided_slice %243 {offsets = [0, 0], sizes = [8, 256], strides = [1, 1]} : vector<32x256xf32> to vector<8x256xf32>
    %245 = arith.negf %244 : vector<8x256xf32>
    %246 = math.exp %245 : vector<8x256xf32>
    %cst_94 = arith.constant 1.000000e+00 : f32
    %247 = vector.broadcast %cst_94 : f32 to vector<8x256xf32>
    %248 = arith.addf %247, %246 : vector<8x256xf32>
    %249 = arith.divf %247, %248 : vector<8x256xf32>
    %250 = vector.extract_strided_slice %243 {offsets = [8, 0], sizes = [8, 256], strides = [1, 1]} : vector<32x256xf32> to vector<8x256xf32>
    %251 = arith.negf %250 : vector<8x256xf32>
    %252 = math.exp %251 : vector<8x256xf32>
    %cst_95 = arith.constant 1.000000e+00 : f32
    %253 = vector.broadcast %cst_95 : f32 to vector<8x256xf32>
    %254 = arith.addf %253, %252 : vector<8x256xf32>
    %255 = arith.divf %253, %254 : vector<8x256xf32>
    %256 = vector.extract_strided_slice %243 {offsets = [16, 0], sizes = [8, 256], strides = [1, 1]} : vector<32x256xf32> to vector<8x256xf32>
    %257 = arith.negf %256 : vector<8x256xf32>
    %258 = math.exp %257 : vector<8x256xf32>
    %cst_96 = arith.constant 1.000000e+00 : f32
    %259 = vector.broadcast %cst_96 : f32 to vector<8x256xf32>
    %260 = arith.addf %259, %258 : vector<8x256xf32>
    %261 = arith.divf %259, %260 : vector<8x256xf32>
    %262 = vector.extract_strided_slice %243 {offsets = [24, 0], sizes = [8, 256], strides = [1, 1]} : vector<32x256xf32> to vector<8x256xf32>
    %263 = math.tanh %262 : vector<8x256xf32>
    %264 = arith.index_cast %c1_i32_42 : i32 to index
    %c0_97 = arith.constant 0 : index
    %c0_98 = arith.constant 0 : index
    %265 = vector.load %arg2[%264, %c0_97, %c0_98] : memref<2x8x256xf32, #tpu.memory_space<vmem>>, vector<1x8x256xf32>
    %266 = vector.shape_cast %265 : vector<1x8x256xf32> to vector<8x256xf32>
    %267 = arith.mulf %255, %266 : vector<8x256xf32>
    %268 = arith.mulf %249, %263 : vector<8x256xf32>
    %269 = arith.addf %267, %268 : vector<8x256xf32>
    %270 = math.tanh %269 : vector<8x256xf32>
    %271 = arith.mulf %261, %270 : vector<8x256xf32>
    %272 = arith.index_cast %c1_i32_42 : i32 to index
    %c0_99 = arith.constant 0 : index
    %c0_100 = arith.constant 0 : index
    %273 = vector.load %arg9[%272, %c0_99, %c0_100] : memref<2x8x256xf32, #tpu.memory_space<vmem>>, vector<1x8x256xf32>
    %274 = vector.shape_cast %273 : vector<1x8x256xf32> to vector<8x256xf32>
    %275 = vector.shape_cast %271 : vector<8x256xf32> to vector<1x8x256xf32>
    tpu.vector_store %arg9[%272, %c0_99, %c0_100], %275 {strides = array<i32>} : memref<2x8x256xf32, #tpu.memory_space<vmem>>, vector<1x8x256xf32>,
    %276 = arith.index_cast %c1_i32_42 : i32 to index
    %c0_101 = arith.constant 0 : index
    %c0_102 = arith.constant 0 : index
    %277 = vector.load %arg10[%276, %c0_101, %c0_102] : memref<2x8x256xf32, #tpu.memory_space<vmem>>, vector<1x8x256xf32>
    %278 = vector.shape_cast %277 : vector<1x8x256xf32> to vector<8x256xf32>
    %279 = vector.shape_cast %269 : vector<8x256xf32> to vector<1x8x256xf32>
    tpu.vector_store %arg10[%276, %c0_101, %c0_102], %279 {strides = array<i32>} : memref<2x8x256xf32, #tpu.memory_space<vmem>>, vector<1x8x256xf32>,
    %c2_i32 = arith.constant 2 : i32
    return
  }
  func.func @transform_0(%arg0: i32) -> (i32, i32, i32) {
    %c0_i32 = arith.constant 0 : i32
    %c0_i32_0 = arith.constant 0 : i32
    %c0_i32_1 = arith.constant 0 : i32
    return %arg0, %c0_i32, %c0_i32_0 : i32, i32, i32
  }
  func.func @transform_1(%arg0: i32) -> (i32, i32, i32) {
    %c0_i32 = arith.constant 0 : i32
    %c0_i32_0 = arith.constant 0 : i32
    %c0_i32_1 = arith.constant 0 : i32
    return %arg0, %c0_i32, %c0_i32_0 : i32, i32, i32
  }
  func.func @transform_2(%arg0: i32) -> (i32, i32) {
    %c0_i32 = arith.constant 0 : i32
    %c0_i32_0 = arith.constant 0 : i32
    %c0_i32_1 = arith.constant 0 : i32
    return %c0_i32, %c0_i32_0 : i32, i32
  }
  func.func @transform_3(%arg0: i32) -> (i32, i32) {
    %c0_i32 = arith.constant 0 : i32
    %c0_i32_0 = arith.constant 0 : i32
    %c0_i32_1 = arith.constant 0 : i32
    return %c0_i32, %c0_i32_0 : i32, i32
  }
  func.func @transform_4(%arg0: i32) -> (i32, i32) {
    %c0_i32 = arith.constant 0 : i32
    %c0_i32_0 = arith.constant 0 : i32
    %c0_i32_1 = arith.constant 0 : i32
    return %c0_i32, %c0_i32_0 : i32, i32
  }
  func.func @transform_5(%arg0: i32) -> (i32, i32) {
    %c0_i32 = arith.constant 0 : i32
    %c0_i32_0 = arith.constant 0 : i32
    %c0_i32_1 = arith.constant 0 : i32
    return %c0_i32, %c0_i32_0 : i32, i32
  }
  func.func @transform_6(%arg0: i32) -> (i32, i32) {
    %c0_i32 = arith.constant 0 : i32
    %c0_i32_0 = arith.constant 0 : i32
    %c0_i32_1 = arith.constant 0 : i32
    return %c0_i32, %c0_i32_0 : i32, i32
  }
  func.func @transform_7(%arg0: i32) -> (i32, i32) {
    %c0_i32 = arith.constant 0 : i32
    %c0_i32_0 = arith.constant 0 : i32
    %c0_i32_1 = arith.constant 0 : i32
    return %c0_i32, %c0_i32_0 : i32, i32
  }
  func.func @transform_8(%arg0: i32) -> (i32, i32, i32) {
    %c0_i32 = arith.constant 0 : i32
    %c0_i32_0 = arith.constant 0 : i32
    %c0_i32_1 = arith.constant 0 : i32
    return %arg0, %c0_i32, %c0_i32_0 : i32, i32, i32
  }
  func.func @transform_9(%arg0: i32) -> (i32, i32, i32) {
    %c0_i32 = arith.constant 0 : i32
    %c0_i32_0 = arith.constant 0 : i32
    %c0_i32_1 = arith.constant 0 : i32
    return %arg0, %c0_i32, %c0_i32_0 : i32, i32, i32
  }
}

</mosaic_0001>

<llo_original>
// kernel: attentive_conv_lstm_cell.1
$region0: #{attentive_conv_lstm_cell.1}
  #allocation0 [shape = 'u32[]', space=smem, size = 0x4, offset = 0x4, fixed_abs, tag = 'smem constant byte address 0x4 - core index']
  #allocation1 [shape = 'u32[144,128]{1,0:T(1,128)}', space=vmem, size = 0x12000, scoped, tag = 'internal scratch']
  %s0 = inlined_call_operand.vmem [shape: f32[4,16,256], index: 0, kind: input, shape index: {}]
  %s1 = inlined_call_operand.vmem [shape: f32[4,8,256], index: 1, kind: input, shape index: {}]
  %s2 = inlined_call_operand.vmem [shape: f32[9,256], index: 2, kind: input, shape index: {}]
  %s3 = inlined_call_operand.vmem [shape: f32[40,144], index: 3, kind: input, shape index: {}]
  %s4 = inlined_call_operand.vmem [shape: f32[8,1], index: 4, kind: input, shape index: {}]
  %s5 = inlined_call_operand.vmem [shape: f32[8,1], index: 5, kind: input, shape index: {}]
  %s6 = inlined_call_operand.vmem [shape: f32[32,72], index: 6, kind: input, shape index: {}]
  %s7 = inlined_call_operand.vmem [shape: f32[32,1], index: 7, kind: input, shape index: {}]
  %s8 = inlined_call_operand.vmem [shape: f32[4,8,256], index: 8, kind: output, shape index: {0}]
  %s9 = inlined_call_operand.vmem [shape: f32[4,8,256], index: 9, kind: output, shape index: {1}]
  %10 = xla_tuple %s8, %s9
  %s11 = sld [smem:[#allocation0]]
  $region73: #{attentive_conv_lstm_cell.1} parent=0
    _
  %s13 = ssub.s32 1, %s11
  %s14 = scalar_select 0, %s13, %s11
  loop: start=0, step=1, limit=4
  $region2: #{attentive_conv_lstm_cell.1} parent=0 // loop_pre_header
    _
  $region3: #{attentive_conv_lstm_cell.1} parent=0 // loop_header
    %s16 = sphi 0, %s20
    %p17 = scmp.ge.s32.totalorder %s16, 4
    %s26 = sphi 0, %s28
    %s29 = sphi 0, %s26
    %s30 = sphi 0, %s29
    %s46 = sphi 0, %s30
    %s52 = sphi 0, %s54
    %s55 = sphi 0, %s52
    %s56 = sphi 0, %s55
    %s72 = sphi 0, %s56
    %s76 = sphi 0, %s76
    %s78 = sphi 0, %s76
    %s79 = sphi 0, %s78
    %s93 = sphi 0, %s79
    %s97 = sphi 0, %s97
    %s99 = sphi 0, %s97
    %s100 = sphi 0, %s99
    %s114 = sphi 0, %s100
    %s118 = sphi 0, %s118
    %s120 = sphi 0, %s118
    %s121 = sphi 0, %s120
    %s135 = sphi 0, %s121
    %s139 = sphi 0, %s139
    %s141 = sphi 0, %s139
    %s142 = sphi 0, %s141
    %s156 = sphi 0, %s142
    %s160 = sphi 0, %s160
    %s162 = sphi 0, %s160
    %s163 = sphi 0, %s162
    %s177 = sphi 0, %s163
    %s181 = sphi 0, %s181
    %s183 = sphi 0, %s181
    %s184 = sphi 0, %s183
    %s198 = sphi 0, %s184
    %s204 = sphi 0, %s206
    %s207 = sphi 0, %s204
    %s208 = sphi 0, %s207
    %s224 = sphi 0, %s208
    %s230 = sphi 0, %s232
    %s233 = sphi 0, %s230
    %s234 = sphi 0, %s233
    %s250 = sphi 0, %s234
  $region4: #{attentive_conv_lstm_cell.1} parent=0 // loop_header_branch
    %19 = sbr.rel (%p17) target = $region8
  $region5: #{attentive_conv_lstm_cell.1} parent=0 // loop_body
    %s21 = ssub.s32 %s16, 1
    %s22 = ssub.s32 %s16, 2
    %s23 = sadd.s32 %s16, 1
    %s24 = ssub.s32 %s16, %s23
    %p25 = scmp.eq.s32.totalorder %s24, 0
    %s27 = sadd.s32 %s26, 1
    %s28 = scalar_select %p25, %s26, %s27
    %p31 = pneg %p25
    %p32 = scmp.eq.s32.totalorder %s16, 1
    %p33 = por %p31, %p32
    %p34 = scmp.ne.s32.totalorder %s26, %s29
    %p35 = scmp.eq.s32.totalorder %s16, 0
    %p36 = por %p34, %p35
    %p37 = scmp.ne.s32.totalorder %s26, %s29
    %p38 = scmp.eq.s32.totalorder %s21, 1
    %p39 = por %p37, %p38
    %p40 = scmp.ne.s32.totalorder %s29, %s30
    %p41 = scmp.eq.s32.totalorder %s21, 0
    %p42 = por %p40, %p41
    %p43 = scmp.ne.s32.totalorder %s29, %s30
    %p44 = scmp.eq.s32.totalorder %s22, 1
    %p45 = por %p43, %p44
    %p47 = scmp.ne.s32.totalorder %s30, %s46
    %p48 = scmp.eq.s32.totalorder %s22, 0
    %p49 = por %p47, %p48
    %s50 = ssub.s32 %s16, %s23
    %p51 = scmp.eq.s32.totalorder %s50, 0
    %s53 = sadd.s32 %s52, 1
    %s54 = scalar_select %p51, %s52, %s53
    %p57 = pneg %p51
    %p58 = scmp.eq.s32.totalorder %s16, 1
    %p59 = por %p57, %p58
    %p60 = scmp.ne.s32.totalorder %s52, %s55
    %p61 = scmp.eq.s32.totalorder %s16, 0
    %p62 = por %p60, %p61
    %p63 = scmp.ne.s32.totalorder %s52, %s55
    %p64 = scmp.eq.s32.totalorder %s21, 1
    %p65 = por %p63, %p64
    %p66 = scmp.ne.s32.totalorder %s55, %s56
    %p67 = scmp.eq.s32.totalorder %s21, 0
    %p68 = por %p66, %p67
    %p69 = scmp.ne.s32.totalorder %s55, %s56
    %p70 = scmp.eq.s32.totalorder %s22, 1
    %p71 = por %p69, %p70
    %p73 = scmp.ne.s32.totalorder %s56, %s72
    %p74 = scmp.eq.s32.totalorder %s22, 0
    %p75 = por %p73, %p74
    %s77 = sadd.s32 %s76, 1
    %p80 = scmp.eq.s32.totalorder %s16, 1
    %p81 = scmp.ne.s32.totalorder %s76, %s78
    %p82 = scmp.eq.s32.totalorder %s16, 0
    %p83 = por %p81, %p82
    %p84 = scmp.ne.s32.totalorder %s76, %s78
    %p85 = scmp.eq.s32.totalorder %s21, 1
    %p86 = por %p84, %p85
    %p87 = scmp.ne.s32.totalorder %s78, %s79
    %p88 = scmp.eq.s32.totalorder %s21, 0
    %p89 = por %p87, %p88
    %p90 = scmp.ne.s32.totalorder %s78, %s79
    %p91 = scmp.eq.s32.totalorder %s22, 1
    %p92 = por %p90, %p91
    %p94 = scmp.ne.s32.totalorder %s79, %s93
    %p95 = scmp.eq.s32.totalorder %s22, 0
    %p96 = por %p94, %p95
    %s98 = sadd.s32 %s97, 1
    %p101 = scmp.eq.s32.totalorder %s16, 1
    %p102 = scmp.ne.s32.totalorder %s97, %s99
    %p103 = scmp.eq.s32.totalorder %s16, 0
    %p104 = por %p102, %p103
    %p105 = scmp.ne.s32.totalorder %s97, %s99
    %p106 = scmp.eq.s32.totalorder %s21, 1
    %p107 = por %p105, %p106
    %p108 = scmp.ne.s32.totalorder %s99, %s100
    %p109 = scmp.eq.s32.totalorder %s21, 0
    %p110 = por %p108, %p109
    %p111 = scmp.ne.s32.totalorder %s99, %s100
    %p112 = scmp.eq.s32.totalorder %s22, 1
    %p113 = por %p111, %p112
    %p115 = scmp.ne.s32.totalorder %s100, %s114
    %p116 = scmp.eq.s32.totalorder %s22, 0
    %p117 = por %p115, %p116
    %s119 = sadd.s32 %s118, 1
    %p122 = scmp.eq.s32.totalorder %s16, 1
    %p123 = scmp.ne.s32.totalorder %s118, %s120
    %p124 = scmp.eq.s32.totalorder %s16, 0
    %p125 = por %p123, %p124
    %p126 = scmp.ne.s32.totalorder %s118, %s120
    %p127 = scmp.eq.s32.totalorder %s21, 1
    %p128 = por %p126, %p127
    %p129 = scmp.ne.s32.totalorder %s120, %s121
    %p130 = scmp.eq.s32.totalorder %s21, 0
    %p131 = por %p129, %p130
    %p132 = scmp.ne.s32.totalorder %s120, %s121
    %p133 = scmp.eq.s32.totalorder %s22, 1
    %p134 = por %p132, %p133
    %p136 = scmp.ne.s32.totalorder %s121, %s135
    %p137 = scmp.eq.s32.totalorder %s22, 0
    %p138 = por %p136, %p137
    %s140 = sadd.s32 %s139, 1
    %p143 = scmp.eq.s32.totalorder %s16, 1
    %p144 = scmp.ne.s32.totalorder %s139, %s141
    %p145 = scmp.eq.s32.totalorder %s16, 0
    %p146 = por %p144, %p145
    %p147 = scmp.ne.s32.totalorder %s139, %s141
    %p148 = scmp.eq.s32.totalorder %s21, 1
    %p149 = por %p147, %p148
    %p150 = scmp.ne.s32.totalorder %s141, %s142
    %p151 = scmp.eq.s32.totalorder %s21, 0
    %p152 = por %p150, %p151
    %p153 = scmp.ne.s32.totalorder %s141, %s142
    %p154 = scmp.eq.s32.totalorder %s22, 1
    %p155 = por %p153, %p154
    %p157 = scmp.ne.s32.totalorder %s142, %s156
    %p158 = scmp.eq.s32.totalorder %s22, 0
    %p159 = por %p157, %p158
    %s161 = sadd.s32 %s160, 1
    %p164 = scmp.eq.s32.totalorder %s16, 1
    %p165 = scmp.ne.s32.totalorder %s160, %s162
    %p166 = scmp.eq.s32.totalorder %s16, 0
    %p167 = por %p165, %p166
    %p168 = scmp.ne.s32.totalorder %s160, %s162
    %p169 = scmp.eq.s32.totalorder %s21, 1
    %p170 = por %p168, %p169
    %p171 = scmp.ne.s32.totalorder %s162, %s163
    %p172 = scmp.eq.s32.totalorder %s21, 0
    %p173 = por %p171, %p172
    %p174 = scmp.ne.s32.totalorder %s162, %s163
    %p175 = scmp.eq.s32.totalorder %s22, 1
    %p176 = por %p174, %p175
    %p178 = scmp.ne.s32.totalorder %s163, %s177
    %p179 = scmp.eq.s32.totalorder %s22, 0
    %p180 = por %p178, %p179
    %s182 = sadd.s32 %s181, 1
    %p185 = scmp.eq.s32.totalorder %s16, 1
    %p186 = scmp.ne.s32.totalorder %s181, %s183
    %p187 = scmp.eq.s32.totalorder %s16, 0
    %p188 = por %p186, %p187
    %p189 = scmp.ne.s32.totalorder %s181, %s183
    %p190 = scmp.eq.s32.totalorder %s21, 1
    %p191 = por %p189, %p190
    %p192 = scmp.ne.s32.totalorder %s183, %s184
    %p193 = scmp.eq.s32.totalorder %s21, 0
    %p194 = por %p192, %p193
    %p195 = scmp.ne.s32.totalorder %s183, %s184
    %p196 = scmp.eq.s32.totalorder %s22, 1
    %p197 = por %p195, %p196
    %p199 = scmp.ne.s32.totalorder %s184, %s198
    %p200 = scmp.eq.s32.totalorder %s22, 0
    %p201 = por %p199, %p200
    %s202 = ssub.s32 %s16, %s23
    %p203 = scmp.eq.s32.totalorder %s202, 0
    %s205 = sadd.s32 %s204, 1
    %s206 = scalar_select %p203, %s204, %s205
    %p209 = pneg %p203
    %p210 = scmp.eq.s32.totalorder %s16, 1
    %p211 = por %p209, %p210
    %p212 = scmp.ne.s32.totalorder %s204, %s207
    %p213 = scmp.eq.s32.totalorder %s16, 0
    %p214 = por %p212, %p213
    %p215 = scmp.ne.s32.totalorder %s204, %s207
    %p216 = scmp.eq.s32.totalorder %s21, 1
    %p217 = por %p215, %p216
    %p218 = scmp.ne.s32.totalorder %s207, %s208
    %p219 = scmp.eq.s32.totalorder %s21, 0
    %p220 = por %p218, %p219
    %p221 = scmp.ne.s32.totalorder %s207, %s208
    %p222 = scmp.eq.s32.totalorder %s22, 1
    %p223 = por %p221, %p222
    %p225 = scmp.ne.s32.totalorder %s208, %s224
    %p226 = scmp.eq.s32.totalorder %s22, 0
    %p227 = por %p225, %p226
    %s228 = ssub.s32 %s16, %s23
    %p229 = scmp.eq.s32.totalorder %s228, 0
    %s231 = sadd.s32 %s230, 1
    %s232 = scalar_select %p229, %s230, %s231
    %p235 = pneg %p229
    %p236 = scmp.eq.s32.totalorder %s16, 1
    %p237 = por %p235, %p236
    %p238 = scmp.ne.s32.totalorder %s230, %s233
    %p239 = scmp.eq.s32.totalorder %s16, 0
    %p240 = por %p238, %p239
    %p241 = scmp.ne.s32.totalorder %s230, %s233
    %p242 = scmp.eq.s32.totalorder %s21, 1
    %p243 = por %p241, %p242
    %p244 = scmp.ne.s32.totalorder %s233, %s234
    %p245 = scmp.eq.s32.totalorder %s21, 0
    %p246 = por %p244, %p245
    %p247 = scmp.ne.s32.totalorder %s233, %s234
    %p248 = scmp.eq.s32.totalorder %s22, 1
    %p249 = por %p247, %p248
    %p251 = scmp.ne.s32.totalorder %s234, %s250
    %p252 = scmp.eq.s32.totalorder %s22, 0
    %p253 = por %p251, %p252
    %p254 = scmp.le.s32.totalorder 1, %s16
    %p255 = scmp.lt.s32.totalorder %s16, 3
    %p256 = pnand %p254, %p255
    %p257 = pneg %p256
    // Predicated region
    $region9: #{attentive_conv_lstm_cell.1} parent=5 // pred_check
      _
    $region10: #{attentive_conv_lstm_cell.1} parent=5 // pred_check_branch
      %259 = sbr.rel (%p256) target = $region12
    $region11: #{attentive_conv_lstm_cell.1} parent=5 // pred_region
      %s260 = ssub.s32 %s16, 1
      // Predicated region
      $region13: #{attentive_conv_lstm_cell.1} parent=11 // pred_check
        %p261 = pneg %p89
      $region14: #{attentive_conv_lstm_cell.1} parent=11 // pred_check_branch
        %263 = sbr.rel (%p261) target = $region16
      $region15: #{attentive_conv_lstm_cell.1} parent=11 // pred_region
        _
      $region16: #{attentive_conv_lstm_cell.1} parent=11 // pred_fallthru
        _
      // Predicated region
      $region17: #{attentive_conv_lstm_cell.1} parent=11 // pred_check
        %p264 = pneg %p110
      $region18: #{attentive_conv_lstm_cell.1} parent=11 // pred_check_branch
        %266 = sbr.rel (%p264) target = $region20
      $region19: #{attentive_conv_lstm_cell.1} parent=11 // pred_region
        _
      $region20: #{attentive_conv_lstm_cell.1} parent=11 // pred_fallthru
        _
      // Predicated region
      $region21: #{attentive_conv_lstm_cell.1} parent=11 // pred_check
        %p267 = pneg %p131
      $region22: #{attentive_conv_lstm_cell.1} parent=11 // pred_check_branch
        %269 = sbr.rel (%p267) target = $region24
      $region23: #{attentive_conv_lstm_cell.1} parent=11 // pred_region
        _
      $region24: #{attentive_conv_lstm_cell.1} parent=11 // pred_fallthru
        _
      // Predicated region
      $region25: #{attentive_conv_lstm_cell.1} parent=11 // pred_check
        %p270 = pneg %p152
      $region26: #{attentive_conv_lstm_cell.1} parent=11 // pred_check_branch
        %272 = sbr.rel (%p270) target = $region28
      $region27: #{attentive_conv_lstm_cell.1} parent=11 // pred_region
        _
      $region28: #{attentive_conv_lstm_cell.1} parent=11 // pred_fallthru
        _
      // Predicated region
      $region29: #{attentive_conv_lstm_cell.1} parent=11 // pred_check
        %p273 = pneg %p173
      $region30: #{attentive_conv_lstm_cell.1} parent=11 // pred_check_branch
        %275 = sbr.rel (%p273) target = $region32
      $region31: #{attentive_conv_lstm_cell.1} parent=11 // pred_region
        _
      $region32: #{attentive_conv_lstm_cell.1} parent=11 // pred_fallthru
        _
      // Predicated region
      $region33: #{attentive_conv_lstm_cell.1} parent=11 // pred_check
        %p276 = pneg %p194
      $region34: #{attentive_conv_lstm_cell.1} parent=11 // pred_check_branch
        %278 = sbr.rel (%p276) target = $region36
      $region35: #{attentive_conv_lstm_cell.1} parent=11 // pred_region
        _
      $region36: #{attentive_conv_lstm_cell.1} parent=11 // pred_fallthru
        _
    $region12: #{attentive_conv_lstm_cell.1} parent=5 // pred_fallthru
      _
    %p279 = scmp.lt.s32.totalorder %s16, 2
    // Predicated region
    $region37: #{attentive_conv_lstm_cell.1} parent=5 // pred_check
      %p280 = pneg %p279
    $region38: #{attentive_conv_lstm_cell.1} parent=5 // pred_check_branch
      %282 = sbr.rel (%p280) target = $region40
    $region39: #{attentive_conv_lstm_cell.1} parent=5 // pred_region
      // Predicated region
      $region41: #{attentive_conv_lstm_cell.1} parent=39 // pred_check
        %p283 = pneg %p36
      $region42: #{attentive_conv_lstm_cell.1} parent=39 // pred_check_branch
        %285 = sbr.rel (%p283) target = $region44
      $region43: #{attentive_conv_lstm_cell.1} parent=39 // pred_region
        %s286 = smul.u32 2, %s16
        %p287 = scmp.lt.s32.totalorder %s286, 3
        %s288 = scalar_select %p287, %s286, 3
        %s289 = smul.addr %s288, 4
        %s290 = smul.addr %s289, 8
        %s291 = scalar_lea.vmem %s0, %s290
        %s292 = smul.u32 2, %s16
      $region44: #{attentive_conv_lstm_cell.1} parent=39 // pred_fallthru
        _
      // Predicated region
      $region45: #{attentive_conv_lstm_cell.1} parent=39 // pred_check
        %p293 = pneg %p62
      $region46: #{attentive_conv_lstm_cell.1} parent=39 // pred_check_branch
        %295 = sbr.rel (%p293) target = $region48
      $region47: #{attentive_conv_lstm_cell.1} parent=39 // pred_region
        %s296 = smul.u32 2, %s16
        %p297 = scmp.lt.s32.totalorder %s296, 3
        %s298 = scalar_select %p297, %s296, 3
        %s299 = smul.addr %s298, 2
        %s300 = smul.addr %s299, 8
        %s301 = scalar_lea.vmem %s1, %s300
        %s302 = smul.u32 2, %s16
      $region48: #{attentive_conv_lstm_cell.1} parent=39 // pred_fallthru
        _
    $region40: #{attentive_conv_lstm_cell.1} parent=5 // pred_fallthru
      _
    %p303 = scmp.le.s32.totalorder 1, %s16
    %p304 = scmp.lt.s32.totalorder %s16, 3
    %p305 = pnand %p303, %p304
    %p306 = pneg %p305
    // Predicated region
    $region49: #{attentive_conv_lstm_cell.1} parent=5 // pred_check
      _
    $region50: #{attentive_conv_lstm_cell.1} parent=5 // pred_check_branch
      %308 = sbr.rel (%p305) target = $region52
    $region51: #{attentive_conv_lstm_cell.1} parent=5 // pred_region
      %s309 = ssub.s32 %s16, 1
      %s310 = smul.u32 2, %s21
      %p311 = scmp.lt.s32.totalorder %s310, 3
      %s312 = scalar_select %p311, %s310, 3
      %s313 = smul.addr %s312, 4
      %s314 = smul.addr %s313, 8
      %s315 = scalar_lea.vmem %s0, %s314
      %p316 = pneg %p42
      %p317 = pneg %p39
      %s318 = smul.u32 2, %s21
      %p319 = scmp.lt.s32.totalorder %s318, 3
      %s320 = scalar_select %p319, %s318, 3
      %s321 = smul.addr %s320, 2
      %s322 = smul.addr %s321, 8
      %s323 = scalar_lea.vmem %s1, %s322
      %p324 = pneg %p68
      %p325 = pneg %p65
      %p326 = pneg %p89
      %p327 = pneg %p86
      %p328 = pneg %p110
      %p329 = pneg %p107
      %p330 = pneg %p131
      %p331 = pneg %p128
      %p332 = pneg %p152
      %p333 = pneg %p149
      %p334 = pneg %p173
      %p335 = pneg %p170
      %p336 = pneg %p194
      %p337 = pneg %p191
      %p338 = pneg %p220
      %p339 = pneg %p217
      %s340 = smul.u32 2, %s21
      %p341 = scmp.lt.s32.totalorder %s340, 3
      %s342 = scalar_select %p341, %s340, 3
      %s343 = smul.addr %s342, 2
      %s344 = smul.addr %s343, 8
      %s345 = scalar_lea.vmem %s8, %s344
      %p346 = pneg %p246
      %p347 = pneg %p243
      %s348 = smul.u32 2, %s21
      %p349 = scmp.lt.s32.totalorder %s348, 3
      %s350 = scalar_select %p349, %s348, 3
      %s351 = smul.addr %s350, 2
      %s352 = smul.addr %s351, 8
      %s353 = scalar_lea.vmem %s9, %s352
      %s354 = smul.u32 2, %s21
      %p355 = scmp.lt.s32.totalorder %s354, 3
      %s356 = scalar_select %p355, %s354, 3
      %s357 = smul.addr %s356, 4
      %s358 = smul.addr %s357, 8
      %s359 = scalar_lea.vmem %s0, %s358
      %s360 = smul.u32 2, %s21
      %s361 = smul.u32 2, %s21
      %p362 = scmp.lt.s32.totalorder %s361, 3
      %s363 = scalar_select %p362, %s361, 3
      %s364 = smul.addr %s363, 2
      %s365 = smul.addr %s364, 8
      %s366 = scalar_lea.vmem %s1, %s365
      %s367 = smul.u32 2, %s21
      %s368 = smul.u32 2, %s21
      %p369 = scmp.lt.s32.totalorder %s368, 3
      %s370 = scalar_select %p369, %s368, 3
      %s371 = smul.addr %s370, 2
      %s372 = smul.addr %s371, 8
      %s373 = scalar_lea.vmem %s8, %s372
      %s374 = smul.u32 2, %s21
      %s375 = smul.u32 2, %s21
      %p376 = scmp.lt.s32.totalorder %s375, 3
      %s377 = scalar_select %p376, %s375, 3
      %s378 = smul.addr %s377, 2
      %s379 = smul.addr %s378, 8
      %s380 = scalar_lea.vmem %s9, %s379
      %s381 = smul.u32 2, %s21
      %v382 = vld [vmem:[%s359] sm:$0xff]
      %v383 = vld [vmem:[%s359 + $0x8] sm:$0xff]
      %v384 = vld [vmem:[%s359 + $0x10] sm:$0xff]
      %v385 = vld [vmem:[%s359 + $0x18] sm:$0xff]
      %386 = vrot.lane.b32.xlu0 %v382, 17
      %v387 = vpop.permute.xlu0 %386
      %388 = vrot.lane.b32.xlu0 %v384, 17
      %v389 = vpop.permute.xlu0 %388
      %390 = vrot.lane.b32.xlu0 %v383, 17
      %v391 = vpop.permute.xlu0 %390
      %392 = vrot.lane.b32.xlu0 %v385, 17
      %v393 = vpop.permute.xlu0 %392
      %v394 = vlaneseq
      %v395 = vand.u32 %v394, 127
      %vm396 = vcmp.lt.s32.totalorder %v395, 17
      %v397 = vsel %vm396, %v387, %v391
      %v398 = vsel %vm396, %v389, %v393
      %v399 = vsel %vm396, %v391, %v387
      %v400 = vsel %vm396, %v393, %v389
      %v401 = vld [vmem:[%s2] ss:$8 sm:$0x3]
      %v403 = vlaneseq
      %v404 = vshrl.u32 %v403, 7
      %v405 = vsub.s32 0, %v404
      %v406 = vrot.slane %v401, %v405
      %v407 = vlaneseq
      %v408 = vshrl.u32 %v407, 7
      %v409 = vsub.s32 1, %v408
      %v410 = vrot.slane %v401, %v409
      %v413 = vmul.f32 %v399, %v406
      %v414 = vmul.f32 %v397, %v410
      %v415 = vmul.f32 %v400, %v406
      %v416 = vmul.f32 %v398, %v410
      %417 = vrot.lane.b32.xlu0 %v382, 16
      %v418 = vpop.permute.xlu0 %417
      %419 = vrot.lane.b32.xlu0 %v384, 16
      %v420 = vpop.permute.xlu0 %419
      %421 = vrot.lane.b32.xlu0 %v383, 16
      %v422 = vpop.permute.xlu0 %421
      %423 = vrot.lane.b32.xlu0 %v385, 16
      %v424 = vpop.permute.xlu0 %423
      %vm425 = vcmp.lt.s32.totalorder %v395, 16
      %v426 = vsel %vm425, %v418, %v422
      %v427 = vsel %vm425, %v420, %v424
      %v428 = vsel %vm425, %v422, %v418
      %v429 = vsel %vm425, %v424, %v420
      %s430 = scalar_lea.vmem %s2, 1
      %v431 = vld [vmem:[%s430] ss:$8 sm:$0x3]
      %v433 = vlaneseq
      %v434 = vshrl.u32 %v433, 7
      %v435 = vsub.s32 0, %v434
      %v436 = vrot.slane %v431, %v435
      %v437 = vlaneseq
      %v438 = vshrl.u32 %v437, 7
      %v439 = vsub.s32 1, %v438
      %v440 = vrot.slane %v431, %v439
      %v443 = vmul.f32 %v428, %v436
      %v444 = vmul.f32 %v426, %v440
      %v445 = vmul.f32 %v429, %v436
      %v446 = vmul.f32 %v427, %v440
      %447 = vrot.lane.b32.xlu0 %v382, 15
      %v448 = vpop.permute.xlu0 %447
      %449 = vrot.lane.b32.xlu0 %v384, 15
      %v450 = vpop.permute.xlu0 %449
      %451 = vrot.lane.b32.xlu0 %v383, 15
      %v452 = vpop.permute.xlu0 %451
      %453 = vrot.lane.b32.xlu0 %v385, 15
      %v454 = vpop.permute.xlu0 %453
      %vm455 = vcmp.lt.s32.totalorder %v395, 15
      %v456 = vsel %vm455, %v448, %v452
      %v457 = vsel %vm455, %v450, %v454
      %v458 = vsel %vm455, %v452, %v448
      %v459 = vsel %vm455, %v454, %v450
      %s460 = scalar_lea.vmem %s2, 2
      %v461 = vld [vmem:[%s460] ss:$8 sm:$0x3]
      %v463 = vlaneseq
      %v464 = vshrl.u32 %v463, 7
      %v465 = vsub.s32 0, %v464
      %v466 = vrot.slane %v461, %v465
      %v467 = vlaneseq
      %v468 = vshrl.u32 %v467, 7
      %v469 = vsub.s32 1, %v468
      %v470 = vrot.slane %v461, %v469
      %v473 = vmul.f32 %v458, %v466
      %v474 = vmul.f32 %v456, %v470
      %v475 = vmul.f32 %v459, %v466
      %v476 = vmul.f32 %v457, %v470
      %477 = vrot.lane.b32.xlu0 %v382, 1
      %v478 = vpop.permute.xlu0 %477
      %479 = vrot.lane.b32.xlu0 %v384, 1
      %v480 = vpop.permute.xlu0 %479
      %481 = vrot.lane.b32.xlu0 %v383, 1
      %v482 = vpop.permute.xlu0 %481
      %483 = vrot.lane.b32.xlu0 %v385, 1
      %v484 = vpop.permute.xlu0 %483
      %vm485 = vcmp.lt.s32.totalorder %v395, 1
      %v486 = vsel %vm485, %v478, %v482
      %v487 = vsel %vm485, %v480, %v484
      %v488 = vsel %vm485, %v482, %v478
      %v489 = vsel %vm485, %v484, %v480
      %s490 = scalar_lea.vmem %s2, 3
      %v491 = vld [vmem:[%s490] ss:$8 sm:$0x3]
      %v493 = vlaneseq
      %v494 = vshrl.u32 %v493, 7
      %v495 = vsub.s32 0, %v494
      %v496 = vrot.slane %v491, %v495
      %v497 = vlaneseq
      %v498 = vshrl.u32 %v497, 7
      %v499 = vsub.s32 1, %v498
      %v500 = vrot.slane %v491, %v499
      %v503 = vmul.f32 %v488, %v496
      %v504 = vmul.f32 %v486, %v500
      %v505 = vmul.f32 %v489, %v496
      %v506 = vmul.f32 %v487, %v500
      %s507 = scalar_lea.vmem %s2, 4
      %v508 = vld [vmem:[%s507] ss:$8 sm:$0x3]
      %v510 = vlaneseq
      %v511 = vshrl.u32 %v510, 7
      %v512 = vsub.s32 0, %v511
      %v513 = vrot.slane %v508, %v512
      %v514 = vlaneseq
      %v515 = vshrl.u32 %v514, 7
      %v516 = vsub.s32 1, %v515
      %v517 = vrot.slane %v508, %v516
      %v520 = vmul.f32 %v382, %v513
      %v521 = vmul.f32 %v383, %v517
      %v522 = vmul.f32 %v384, %v513
      %v523 = vmul.f32 %v385, %v517
      %524 = vrot.lane.b32.xlu0 %v382, 127
      %v525 = vpop.permute.xlu0 %524
      %526 = vrot.lane.b32.xlu0 %v384, 127
      %v527 = vpop.permute.xlu0 %526
      %528 = vrot.lane.b32.xlu0 %v383, 127
      %v529 = vpop.permute.xlu0 %528
      %530 = vrot.lane.b32.xlu0 %v385, 127
      %v531 = vpop.permute.xlu0 %530
      %vm532 = vcmp.lt.s32.totalorder %v395, 127
      %v533 = vsel %vm532, %v525, %v529
      %v534 = vsel %vm532, %v527, %v531
      %v535 = vsel %vm532, %v529, %v525
      %v536 = vsel %vm532, %v531, %v527
      %s537 = scalar_lea.vmem %s2, 5
      %v538 = vld [vmem:[%s537] ss:$8 sm:$0x3]
      %v540 = vlaneseq
      %v541 = vshrl.u32 %v540, 7
      %v542 = vsub.s32 0, %v541
      %v543 = vrot.slane %v538, %v542
      %v544 = vlaneseq
      %v545 = vshrl.u32 %v544, 7
      %v546 = vsub.s32 1, %v545
      %v547 = vrot.slane %v538, %v546
      %v550 = vmul.f32 %v533, %v543
      %v551 = vmul.f32 %v535, %v547
      %v552 = vmul.f32 %v534, %v543
      %v553 = vmul.f32 %v536, %v547
      %554 = vrot.lane.b32.xlu0 %v382, 113
      %v555 = vpop.permute.xlu0 %554
      %556 = vrot.lane.b32.xlu0 %v384, 113
      %v557 = vpop.permute.xlu0 %556
      %558 = vrot.lane.b32.xlu0 %v383, 113
      %v559 = vpop.permute.xlu0 %558
      %560 = vrot.lane.b32.xlu0 %v385, 113
      %v561 = vpop.permute.xlu0 %560
      %vm562 = vcmp.lt.s32.totalorder %v395, 113
      %v563 = vsel %vm562, %v555, %v559
      %v564 = vsel %vm562, %v557, %v561
      %v565 = vsel %vm562, %v559, %v555
      %v566 = vsel %vm562, %v561, %v557
      %s567 = scalar_lea.vmem %s2, 6
      %v568 = vld [vmem:[%s567] ss:$8 sm:$0x3]
      %v570 = vlaneseq
      %v571 = vshrl.u32 %v570, 7
      %v572 = vsub.s32 0, %v571
      %v573 = vrot.slane %v568, %v572
      %v574 = vlaneseq
      %v575 = vshrl.u32 %v574, 7
      %v576 = vsub.s32 1, %v575
      %v577 = vrot.slane %v568, %v576
      %v580 = vmul.f32 %v563, %v573
      %v581 = vmul.f32 %v565, %v577
      %v582 = vmul.f32 %v564, %v573
      %v583 = vmul.f32 %v566, %v577
      %584 = vrot.lane.b32.xlu0 %v382, 112
      %v585 = vpop.permute.xlu0 %584
      %586 = vrot.lane.b32.xlu0 %v384, 112
      %v587 = vpop.permute.xlu0 %586
      %588 = vrot.lane.b32.xlu0 %v383, 112
      %v589 = vpop.permute.xlu0 %588
      %590 = vrot.lane.b32.xlu0 %v385, 112
      %v591 = vpop.permute.xlu0 %590
      %vm592 = vcmp.lt.s32.totalorder %v395, 112
      %v593 = vsel %vm592, %v585, %v589
      %v594 = vsel %vm592, %v587, %v591
      %v595 = vsel %vm592, %v589, %v585
      %v596 = vsel %vm592, %v591, %v587
      %s597 = scalar_lea.vmem %s2, 7
      %v598 = vld [vmem:[%s597] ss:$8 sm:$0x3]
      %v600 = vlaneseq
      %v601 = vshrl.u32 %v600, 7
      %v602 = vsub.s32 0, %v601
      %v603 = vrot.slane %v598, %v602
      %v604 = vlaneseq
      %v605 = vshrl.u32 %v604, 7
      %v606 = vsub.s32 1, %v605
      %v607 = vrot.slane %v598, %v606
      %v610 = vmul.f32 %v593, %v603
      %v611 = vmul.f32 %v595, %v607
      %v612 = vmul.f32 %v594, %v603
      %v613 = vmul.f32 %v596, %v607
      %614 = vrot.lane.b32.xlu0 %v382, 111
      %v615 = vpop.permute.xlu0 %614
      %616 = vrot.lane.b32.xlu0 %v384, 111
      %v617 = vpop.permute.xlu0 %616
      %618 = vrot.lane.b32.xlu0 %v383, 111
      %v619 = vpop.permute.xlu0 %618
      %620 = vrot.lane.b32.xlu0 %v385, 111
      %v621 = vpop.permute.xlu0 %620
      %vm622 = vcmp.lt.s32.totalorder %v395, 111
      %v623 = vsel %vm622, %v615, %v619
      %v624 = vsel %vm622, %v617, %v621
      %v625 = vsel %vm622, %v619, %v615
      %v626 = vsel %vm622, %v621, %v617
      %s627 = scalar_lea.vmem %s2, 16
      %v628 = vld [vmem:[%s627] ss:$8 sm:$0x3]
      %v630 = vlaneseq
      %v631 = vshrl.u32 %v630, 7
      %v632 = vsub.s32 0, %v631
      %v633 = vrot.slane %v628, %v632
      %v634 = vlaneseq
      %v635 = vshrl.u32 %v634, 7
      %v636 = vsub.s32 1, %v635
      %v637 = vrot.slane %v628, %v636
      %v640 = vmul.f32 %v623, %v633
      %v641 = vmul.f32 %v625, %v637
      %v642 = vmul.f32 %v624, %v633
      %v643 = vmul.f32 %v626, %v637
      %v644 = vld [vmem:[%s3] sm:$0xff]
      %v645 = vld [vmem:[%s3 + $0x8] sm:$0xff]
      %v646 = vld [vmem:[%s3 + $0x10] sm:$0xff]
      %v647 = vld [vmem:[%s3 + $0x18] sm:$0xff]
      %v648 = vld [vmem:[%s3 + $0x20] sm:$0xff]
      %v649 = vld [vmem:[%s3 + $0x28] sm:$0xff]
      %v650 = vld [vmem:[%s3 + $0x30] sm:$0xff]
      %v651 = vld [vmem:[%s3 + $0x38] sm:$0xff]
      %v652 = vld [vmem:[%s3 + $0x40] sm:$0xff]
      %v653 = vld [vmem:[%s3 + $0x48] sm:$0xff]
      %vm654 = vcmask 130048
      %v656 = vsel %vm654, %v645, 0
      %v659 = vsel %vm654, %v647, 0
      %v662 = vsel %vm654, %v649, 0
      %v665 = vsel %vm654, %v651, 0
      %v668 = vsel %vm654, %v653, 0
      %670 = vmatprep.subr.mxu0 %v414
      %671 = vmatpush1.msra.mxu0 %v413
      %672 = vmatprep.subr.mxu0 %v416
      %673 = vmatpush1.msra.mxu0 %v415
      %674 = vmatprep.subr.mxu0 %v444
      %675 = vmatpush1.msra.mxu0 %v443
      %676 = vmatprep.subr.mxu0 %v446
      %677 = vmatpush1.msra.mxu0 %v445
      %678 = vmatprep.subr.mxu0 %v474
      %679 = vmatpush1.msra.mxu0 %v473
      %680 = vmatprep.subr.mxu0 %v476
      %681 = vmatpush1.msra.mxu0 %v475
      %682 = vmatprep.subr.mxu0 %v504
      %683 = vmatpush1.msra.mxu0 %v503
      %684 = vmatprep.subr.mxu0 %v506
      %685 = vmatpush1.msra.mxu0 %v505
      %686 = vmatprep.subr.mxu0 %v521
      %687 = vmatpush1.msra.mxu0 %v520
      %688 = vmatprep.subr.mxu0 %v523
      %689 = vmatpush1.msra.mxu0 %v522
      %690 = vmatprep.subr.mxu0 %v551
      %691 = vmatpush1.msra.mxu0 %v550
      %692 = vmatprep.subr.mxu0 %v553
      %693 = vmatpush1.msra.mxu0 %v552
      %694 = vmatprep.subr.mxu0 %v581
      %695 = vmatpush1.msra.mxu0 %v580
      %696 = vmatprep.subr.mxu0 %v583
      %697 = vmatpush1.msra.mxu0 %v582
      %698 = vmatprep.subr.mxu0 %v611
      %699 = vmatpush1.msra.mxu0 %v610
      %700 = vmatprep.subr.mxu0 %v613
      %701 = vmatpush1.msra.mxu0 %v612
      %702 = vmatprep.subr.mxu0 %v641
      %703 = vmatpush1.msra.mxu0 %v640
      %704 = vmatprep.subr.mxu0 %v643
      %705 = vmatpush1.msra.mxu0 %v642
      %706 = vmatprep.subr.mxu0 0.0
      %707 = vmatpush1.msra.mxu0 0.0
      %708 = vmatprep.subr.mxu0 0.0
      %709 = vmatpush1.msra.mxu0 0.0
      %710 = vmatprep.subr.mxu0 0.0
      %711 = vmatpush1.msra.mxu0 0.0
      %712 = vmatprep.subr.mxu0 0.0
      %713 = vmatpush1.msra.mxu0 0.0
      %714 = vmatprep.subr.mxu0 0.0
      %715 = vmatpush1.msra.mxu0 0.0
      %716 = vmatprep.subr.mxu0 0.0
      %717 = vmatpush1.msra.mxu0 0.0
      %718 = vmatprep.subr.mxu0 0.0
      %719 = vmatpush1.msra.mxu0 0.0
      %720 = vmatprep.subr.mxu0 0.0
      %721 = vmatpush1.msra.mxu0 0.0
      %722 = vmatprep.subr.mxu0 0.0
      %723 = vmatpush1.msra.mxu0 0.0
      %724 = vmatprep.subr.mxu0 0.0
      %725 = vmatpush1.msra.mxu0 0.0
      %726 = vmatprep.subr.mxu0 0.0
      %727 = vmatpush1.msra.mxu0 0.0
      %728 = vmatprep.subr.mxu0 0.0
      %729 = vmatpush1.msra.mxu0 0.0
      %730 = vmatprep.subr.mxu0 0.0
      %731 = vmatpush1.msra.mxu0 0.0
      %732 = vmatprep.subr.mxu0 0.0
      %733 = vmatpush1.msra.mxu0 0.0
      %734 = vmatprep.mubr.f32.mxu0 %v656
      %735 = vmatmul.mubr.f32.gmra.mrb[0].mxu0 %v644
      %v736 = vpop.f32.mrb[0].mxu0
      %v737 = vadd.f32 0.0, %v736
      %v738 = vpop.f32.mrb[0].mxu0
      %v739 = vadd.f32 0.0, %v738
      %740 = vmatprep.mubr.f32.mxu0 %v659
      %741 = vmatmul.mubr.f32.gmra.mrb[0].mxu0 %v646
      %v742 = vpop.f32.mrb[0].mxu0
      %v743 = vadd.f32 0.0, %v742
      %v744 = vpop.f32.mrb[0].mxu0
      %v745 = vadd.f32 0.0, %v744
      %746 = vmatprep.mubr.f32.mxu0 %v662
      %747 = vmatmul.mubr.f32.gmra.mrb[0].mxu0 %v648
      %v748 = vpop.f32.mrb[0].mxu0
      %v749 = vadd.f32 0.0, %v748
      %v750 = vpop.f32.mrb[0].mxu0
      %v751 = vadd.f32 0.0, %v750
      %752 = vmatprep.mubr.f32.mxu0 %v665
      %753 = vmatmul.mubr.f32.gmra.mrb[0].mxu0 %v650
      %v754 = vpop.f32.mrb[0].mxu0
      %v755 = vadd.f32 0.0, %v754
      %v756 = vpop.f32.mrb[0].mxu0
      %v757 = vadd.f32 0.0, %v756
      %758 = vmatprep.mubr.f32.mxu0 %v668
      %759 = vmatmul.mubr.f32.gmra.mrb[0].mxu0 %v652
      %v760 = vpop.f32.mrb[0].mxu0
      %v761 = vadd.f32 0.0, %v760
      %v762 = vpop.f32.mrb[0].mxu0
      %v763 = vadd.f32 0.0, %v762
      %764 = vdwg.mxu0
      %v765 = vld [vmem:[%s4] sm:$0xff]
      %767 = vset.pattern.permute.xlu0 0
      %768 = vperm.xlu0 %767, %v765
      %v769 = vpop.permute.xlu0 %768
      %v771 = vadd.f32 %v737, %v769
      %v772 = vadd.f32 %v739, %v769
      %v773 = vtanh.pop %v771
      %v774 = vtanh.pop %v772
      %v775 = vld [vmem:[%s5] sm:$0xff]
      %777 = vset.pattern.permute.xlu0 0
      %778 = vperm.xlu0 %777, %v775
      %v779 = vpop.permute.xlu0 %778
      %v781 = vmul.f32 %v773, %v779
      %v782 = vmul.f32 %v774, %v779
      %v783 = vrot.slane %v781, 4
      %v784 = vadd.f32 %v781, %v783
      %v785 = vrot.slane %v784, 2
      %v786 = vadd.f32 %v784, %v785
      %v787 = vrot.slane %v786, 1
      %v788 = vadd.f32 %v786, %v787
      %v789 = vrot.slane %v782, 4
      %v790 = vadd.f32 %v782, %v789
      %v791 = vrot.slane %v790, 2
      %v792 = vadd.f32 %v790, %v791
      %v793 = vrot.slane %v792, 1
      %v794 = vadd.f32 %v792, %v793
      %v795 = vmax.f32 %v788, %v794
      %796 = vmax.xlane.f32.xlu0 %v795
      %v797 = vpop.xlane.xlu0 %796
      %v798 = vsub.f32 %v788, %v797
      %v799 = vsub.f32 %v794, %v797
      %v800 = vmul.f32 %v798, 1.442695
      %v801 = vpow.pop %v800
      %v802 = vmul.f32 %v799, 1.442695
      %v803 = vpow.pop %v802
      %v804 = vadd.f32 %v801, %v803
      %805 = vadd.xlane.f32.xlu0 %v804
      %v806 = vpop.xlane.xlu0 %805
      %v807 = vrcp.pop %v806
      %v808 = vmul.f32 %v801, %v807
      %v809 = vmul.f32 %v803, %v807
      %810 = vrot.lane.b32.xlu0 %v808, 17
      %v811 = vpop.permute.xlu0 %810
      %812 = vrot.lane.b32.xlu0 %v809, 17
      %v813 = vpop.permute.xlu0 %812
      %v814 = vsel %vm396, %v811, %v813
      %v815 = vsel %vm396, %v813, %v811
      %v816 = vlaneseq
      %v817 = vshrl.u32 %v816, 7
      %v818 = vsub.s32 0, %v817
      %v819 = vrot.slane %v815, %v818
      %v820 = vlaneseq
      %v821 = vshrl.u32 %v820, 7
      %v822 = vsub.s32 0, %v821
      %v823 = vrot.slane %v814, %v822
      %v824 = vmul.f32 %v819, %v413
      %v825 = vmul.f32 %v823, %v414
      %826 = vrot.lane.b32.xlu0 %v808, 16
      %v827 = vpop.permute.xlu0 %826
      %828 = vrot.lane.b32.xlu0 %v809, 16
      %v829 = vpop.permute.xlu0 %828
      %v830 = vsel %vm425, %v827, %v829
      %v831 = vsel %vm425, %v829, %v827
      %v832 = vlaneseq
      %v833 = vshrl.u32 %v832, 7
      %v834 = vsub.s32 0, %v833
      %v835 = vrot.slane %v831, %v834
      %v836 = vlaneseq
      %v837 = vshrl.u32 %v836, 7
      %v838 = vsub.s32 0, %v837
      %v839 = vrot.slane %v830, %v838
      %v840 = vmul.f32 %v835, %v443
      %v841 = vmul.f32 %v839, %v444
      %842 = vrot.lane.b32.xlu0 %v808, 15
      %v843 = vpop.permute.xlu0 %842
      %844 = vrot.lane.b32.xlu0 %v809, 15
      %v845 = vpop.permute.xlu0 %844
      %v846 = vsel %vm455, %v843, %v845
      %v847 = vsel %vm455, %v845, %v843
      %v848 = vlaneseq
      %v849 = vshrl.u32 %v848, 7
      %v850 = vsub.s32 0, %v849
      %v851 = vrot.slane %v847, %v850
      %v852 = vlaneseq
      %v853 = vshrl.u32 %v852, 7
      %v854 = vsub.s32 0, %v853
      %v855 = vrot.slane %v846, %v854
      %v856 = vmul.f32 %v851, %v473
      %v857 = vmul.f32 %v855, %v474
      %858 = vrot.lane.b32.xlu0 %v808, 1
      %v859 = vpop.permute.xlu0 %858
      %860 = vrot.lane.b32.xlu0 %v809, 1
      %v861 = vpop.permute.xlu0 %860
      %v862 = vsel %vm485, %v859, %v861
      %v863 = vsel %vm485, %v861, %v859
      %v864 = vlaneseq
      %v865 = vshrl.u32 %v864, 7
      %v866 = vsub.s32 0, %v865
      %v867 = vrot.slane %v863, %v866
      %v868 = vlaneseq
      %v869 = vshrl.u32 %v868, 7
      %v870 = vsub.s32 0, %v869
      %v871 = vrot.slane %v862, %v870
      %v872 = vmul.f32 %v867, %v503
      %v873 = vmul.f32 %v871, %v504
      %v874 = vmul.f32 %v808, %v520
      %v875 = vmul.f32 %v809, %v521
      %876 = vrot.lane.b32.xlu0 %v808, 127
      %v877 = vpop.permute.xlu0 %876
      %878 = vrot.lane.b32.xlu0 %v809, 127
      %v879 = vpop.permute.xlu0 %878
      %v880 = vsel %vm532, %v877, %v879
      %v881 = vsel %vm532, %v879, %v877
      %v882 = vlaneseq
      %v883 = vshrl.u32 %v882, 7
      %v884 = vsub.s32 0, %v883
      %v885 = vrot.slane %v880, %v884
      %v886 = vlaneseq
      %v887 = vshrl.u32 %v886, 7
      %v888 = vsub.s32 0, %v887
      %v889 = vrot.slane %v881, %v888
      %v890 = vmul.f32 %v885, %v550
      %v891 = vmul.f32 %v889, %v551
      %892 = vrot.lane.b32.xlu0 %v808, 113
      %v893 = vpop.permute.xlu0 %892
      %894 = vrot.lane.b32.xlu0 %v809, 113
      %v895 = vpop.permute.xlu0 %894
      %v896 = vsel %vm562, %v893, %v895
      %v897 = vsel %vm562, %v895, %v893
      %v898 = vlaneseq
      %v899 = vshrl.u32 %v898, 7
      %v900 = vsub.s32 0, %v899
      %v901 = vrot.slane %v896, %v900
      %v902 = vlaneseq
      %v903 = vshrl.u32 %v902, 7
      %v904 = vsub.s32 0, %v903
      %v905 = vrot.slane %v897, %v904
      %v906 = vmul.f32 %v901, %v580
      %v907 = vmul.f32 %v905, %v581
      %908 = vrot.lane.b32.xlu0 %v808, 112
      %v909 = vpop.permute.xlu0 %908
      %910 = vrot.lane.b32.xlu0 %v809, 112
      %v911 = vpop.permute.xlu0 %910
      %v912 = vsel %vm592, %v909, %v911
      %v913 = vsel %vm592, %v911, %v909
      %v914 = vlaneseq
      %v915 = vshrl.u32 %v914, 7
      %v916 = vsub.s32 0, %v915
      %v917 = vrot.slane %v912, %v916
      %v918 = vlaneseq
      %v919 = vshrl.u32 %v918, 7
      %v920 = vsub.s32 0, %v919
      %v921 = vrot.slane %v913, %v920
      %v922 = vmul.f32 %v917, %v610
      %v923 = vmul.f32 %v921, %v611
      %924 = vrot.lane.b32.xlu0 %v808, 111
      %v925 = vpop.permute.xlu0 %924
      %926 = vrot.lane.b32.xlu0 %v809, 111
      %v927 = vpop.permute.xlu0 %926
      %v928 = vsel %vm622, %v925, %v927
      %v929 = vsel %vm622, %v927, %v925
      %v930 = vlaneseq
      %v931 = vshrl.u32 %v930, 7
      %v932 = vsub.s32 0, %v931
      %v933 = vrot.slane %v928, %v932
      %v934 = vlaneseq
      %v935 = vshrl.u32 %v934, 7
      %v936 = vsub.s32 0, %v935
      %v937 = vrot.slane %v929, %v936
      %v938 = vmul.f32 %v933, %v640
      %v939 = vmul.f32 %v937, %v641
      %v940 = vld [vmem:[%s6] sm:$0xff]
      %v941 = vld [vmem:[%s6 + $0x8] sm:$0xff]
      %v942 = vld [vmem:[%s6 + $0x10] sm:$0xff]
      %v943 = vld [vmem:[%s6 + $0x18] sm:$0xff]
      %vm944 = vcmask 588800
      %v946 = vsel %vm944, %v940, 0
      %v949 = vsel %vm944, %v941, 0
      %v952 = vsel %vm944, %v942, 0
      %v955 = vsel %vm944, %v943, 0
      %957 = vmatprep.subr.mxu0 %v825
      %958 = vmatpush1.msra.mxu0 %v824
      %959 = vmatprep.subr.mxu0 %v841
      %960 = vmatpush1.msra.mxu0 %v840
      %961 = vmatprep.subr.mxu0 %v857
      %962 = vmatpush1.msra.mxu0 %v856
      %963 = vmatprep.subr.mxu0 %v873
      %964 = vmatpush1.msra.mxu0 %v872
      %965 = vmatprep.subr.mxu0 %v875
      %966 = vmatpush1.msra.mxu0 %v874
      %967 = vmatprep.subr.mxu0 %v891
      %968 = vmatpush1.msra.mxu0 %v890
      %969 = vmatprep.subr.mxu0 %v907
      %970 = vmatpush1.msra.mxu0 %v906
      %971 = vmatprep.subr.mxu0 %v923
      %972 = vmatpush1.msra.mxu0 %v922
      %973 = vmatprep.subr.mxu0 %v939
      %974 = vmatpush1.msra.mxu0 %v938
      %975 = vmatprep.subr.mxu0 0.0
      %976 = vmatpush1.msra.mxu0 0.0
      %977 = vmatprep.subr.mxu0 0.0
      %978 = vmatpush1.msra.mxu0 0.0
      %979 = vmatprep.subr.mxu0 0.0
      %980 = vmatpush1.msra.mxu0 0.0
      %981 = vmatprep.subr.mxu0 0.0
      %982 = vmatpush1.msra.mxu0 0.0
      %983 = vmatprep.subr.mxu0 0.0
      %984 = vmatpush1.msra.mxu0 0.0
      %985 = vmatprep.subr.mxu0 0.0
      %986 = vmatpush1.msra.mxu0 0.0
      %987 = vmatprep.subr.mxu0 0.0
      %988 = vmatpush1.msra.mxu0 0.0
      %989 = vmatprep.subr.mxu0 0.0
      %990 = vmatpush1.msra.mxu0 0.0
      %991 = vmatprep.subr.mxu0 0.0
      %992 = vmatpush1.msra.mxu0 0.0
      %993 = vmatprep.subr.mxu0 0.0
      %994 = vmatpush1.msra.mxu0 0.0
      %995 = vmatprep.subr.mxu0 0.0
      %996 = vmatpush1.msra.mxu0 0.0
      %997 = vmatprep.subr.mxu0 0.0
      %998 = vmatpush1.msra.mxu0 0.0
      %999 = vmatprep.subr.mxu0 0.0
      %1000 = vmatpush1.msra.mxu0 0.0
      %1001 = vmatprep.subr.mxu0 0.0
      %1002 = vmatpush1.msra.mxu0 0.0
      %1003 = vmatprep.subr.mxu0 0.0
      %1004 = vmatpush1.msra.mxu0 0.0
      %1005 = vmatprep.subr.mxu0 0.0
      %1006 = vmatpush1.msra.mxu0 0.0
      %1007 = vmatprep.subr.mxu0 0.0
      %1008 = vmatpush1.msra.mxu0 0.0
      %1009 = vmatprep.subr.mxu0 0.0
      %1010 = vmatpush1.msra.mxu0 0.0
      %1011 = vmatprep.subr.mxu0 0.0
      %1012 = vmatpush1.msra.mxu0 0.0
      %1013 = vmatprep.subr.mxu0 0.0
      %1014 = vmatpush1.msra.mxu0 0.0
      %1015 = vmatprep.subr.mxu0 0.0
      %1016 = vmatpush1.msra.mxu0 0.0
      %1017 = vmatprep.subr.mxu0 0.0
      %1018 = vmatpush1.msra.mxu0 0.0
      %1019 = vmatprep.subr.mxu0 0.0
      %1020 = vmatpush1.msra.mxu0 0.0
      %1021 = vmatprep.mubr.f32.mxu0 0.0
      %1022 = vmatmul.mubr.f32.gmra.mrb[0].mxu0 %v946
      %v1023 = vpop.f32.mrb[0].mxu0
      %v1024 = vadd.f32 %v743, %v1023
      %v1025 = vpop.f32.mrb[0].mxu0
      %v1026 = vadd.f32 %v745, %v1025
      %1027 = vmatprep.mubr.f32.mxu0 0.0
      %1028 = vmatmul.mubr.f32.gmra.mrb[0].mxu0 %v949
      %v1029 = vpop.f32.mrb[0].mxu0
      %v1030 = vadd.f32 %v749, %v1029
      %v1031 = vpop.f32.mrb[0].mxu0
      %v1032 = vadd.f32 %v751, %v1031
      %1033 = vmatprep.mubr.f32.mxu0 0.0
      %1034 = vmatmul.mubr.f32.gmra.mrb[0].mxu0 %v952
      %v1035 = vpop.f32.mrb[0].mxu0
      %v1036 = vadd.f32 %v755, %v1035
      %v1037 = vpop.f32.mrb[0].mxu0
      %v1038 = vadd.f32 %v757, %v1037
      %1039 = vmatprep.mubr.f32.mxu0 0.0
      %1040 = vmatmul.mubr.f32.gmra.mrb[0].mxu0 %v955
      %v1041 = vpop.f32.mrb[0].mxu0
      %v1042 = vadd.f32 %v761, %v1041
      %v1043 = vpop.f32.mrb[0].mxu0
      %v1044 = vadd.f32 %v763, %v1043
      %1045 = vdwg.mxu0
      %v1046 = vld [vmem:[%s7] sm:$0xff]
      %v1047 = vld [vmem:[%s7 + $0x8] sm:$0xff]
      %v1048 = vld [vmem:[%s7 + $0x10] sm:$0xff]
      %v1049 = vld [vmem:[%s7 + $0x18] sm:$0xff]
      %1051 = vset.pattern.permute.xlu0 0
      %1052 = vperm.xlu0 %1051, %v1046
      %v1053 = vpop.permute.xlu0 %1052
      %1056 = vset.pattern.permute.xlu0 0
      %1057 = vperm.xlu0 %1056, %v1047
      %v1058 = vpop.permute.xlu0 %1057
      %1061 = vset.pattern.permute.xlu0 0
      %1062 = vperm.xlu0 %1061, %v1048
      %v1063 = vpop.permute.xlu0 %1062
      %1066 = vset.pattern.permute.xlu0 0
      %1067 = vperm.xlu0 %1066, %v1049
      %v1068 = vpop.permute.xlu0 %1067
      %v1070 = vadd.f32 %v1024, %v1053
      %v1071 = vadd.f32 %v1026, %v1053
      %v1072 = vadd.f32 %v1030, %v1058
      %v1073 = vadd.f32 %v1032, %v1058
      %v1074 = vadd.f32 %v1036, %v1063
      %v1075 = vadd.f32 %v1038, %v1063
      %v1076 = vadd.f32 %v1042, %v1068
      %v1077 = vadd.f32 %v1044, %v1068
      %v1078 = vxor.u32 %v1070, 2147483648
      %v1079 = vxor.u32 %v1071, 2147483648
      %v1080 = vmul.f32 %v1078, 1.442695
      %v1081 = vpow.pop %v1080
      %v1082 = vmul.f32 %v1079, 1.442695
      %v1083 = vpow.pop %v1082
      %v1084 = vadd.f32 %v1081, 1.0
      %v1085 = vadd.f32 %v1083, 1.0
      %v1086 = vrcp.pop %v1084
      %v1087 = vmul.f32 1.0, %v1086
      %v1088 = vrcp.pop %v1085
      %v1089 = vmul.f32 1.0, %v1088
      %v1090 = vxor.u32 %v1072, 2147483648
      %v1091 = vxor.u32 %v1073, 2147483648
      %v1092 = vmul.f32 %v1090, 1.442695
      %v1093 = vpow.pop %v1092
      %v1094 = vmul.f32 %v1091, 1.442695
      %v1095 = vpow.pop %v1094
      %v1096 = vadd.f32 %v1093, 1.0
      %v1097 = vadd.f32 %v1095, 1.0
      %v1098 = vrcp.pop %v1096
      %v1099 = vmul.f32 1.0, %v1098
      %v1100 = vrcp.pop %v1097
      %v1101 = vmul.f32 1.0, %v1100
      %v1102 = vxor.u32 %v1074, 2147483648
      %v1103 = vxor.u32 %v1075, 2147483648
      %v1104 = vmul.f32 %v1102, 1.442695
      %v1105 = vpow.pop %v1104
      %v1106 = vmul.f32 %v1103, 1.442695
      %v1107 = vpow.pop %v1106
      %v1108 = vadd.f32 %v1105, 1.0
      %v1109 = vadd.f32 %v1107, 1.0
      %v1110 = vrcp.pop %v1108
      %v1111 = vmul.f32 1.0, %v1110
      %v1112 = vrcp.pop %v1109
      %v1113 = vmul.f32 1.0, %v1112
      %v1114 = vtanh.pop %v1076
      %v1115 = vtanh.pop %v1077
      %v1116 = vld [vmem:[%s366] sm:$0xff]
      %v1117 = vld [vmem:[%s366 + $0x8] sm:$0xff]
      %v1118 = vmul.f32 %v1099, %v1116
      %v1119 = vmul.f32 %v1101, %v1117
      %v1120 = vmul.f32 %v1087, %v1114
      %v1121 = vmul.f32 %v1089, %v1115
      %v1122 = vadd.f32 %v1118, %v1120
      %v1123 = vadd.f32 %v1119, %v1121
      %v1124 = vtanh.pop %v1122
      %v1125 = vtanh.pop %v1123
      %v1126 = vmul.f32 %v1111, %v1124
      %v1127 = vmul.f32 %v1113, %v1125
      %1128 = vst [vmem:[%s373] sm:$0xff] %v1126
      %1129 = vst [vmem:[%s373 + $0x8] sm:$0xff] %v1127
      %1130 = vst [vmem:[%s380] sm:$0xff] %v1122
      %1131 = vst [vmem:[%s380 + $0x8] sm:$0xff] %v1123
      %s1132 = scalar_lea.vmem %s359, 32
      %v1133 = vld [vmem:[%s1132] sm:$0xff]
      %v1134 = vld [vmem:[%s1132 + $0x8] sm:$0xff]
      %v1135 = vld [vmem:[%s1132 + $0x10] sm:$0xff]
      %v1136 = vld [vmem:[%s1132 + $0x18] sm:$0xff]
      %1137 = vrot.lane.b32.xlu0 %v1133, 17
      %v1138 = vpop.permute.xlu0 %1137
      %1139 = vrot.lane.b32.xlu0 %v1135, 17
      %v1140 = vpop.permute.xlu0 %1139
      %1141 = vrot.lane.b32.xlu0 %v1134, 17
      %v1142 = vpop.permute.xlu0 %1141
      %1143 = vrot.lane.b32.xlu0 %v1136, 17
      %v1144 = vpop.permute.xlu0 %1143
      %v1145 = vsel %vm396, %v1138, %v1142
      %v1146 = vsel %vm396, %v1140, %v1144
      %v1147 = vsel %vm396, %v1142, %v1138
      %v1148 = vsel %vm396, %v1144, %v1140
      %v1149 = vld [vmem:[%s2] ss:$8 sm:$0x3]
      %v1151 = vlaneseq
      %v1152 = vshrl.u32 %v1151, 7
      %v1153 = vsub.s32 0, %v1152
      %v1154 = vrot.slane %v1149, %v1153
      %v1155 = vlaneseq
      %v1156 = vshrl.u32 %v1155, 7
      %v1157 = vsub.s32 1, %v1156
      %v1158 = vrot.slane %v1149, %v1157
      %v1161 = vmul.f32 %v1147, %v1154
      %v1162 = vmul.f32 %v1145, %v1158
      %v1163 = vmul.f32 %v1148, %v1154
      %v1164 = vmul.f32 %v1146, %v1158
      %1165 = vrot.lane.b32.xlu0 %v1133, 16
      %v1166 = vpop.permute.xlu0 %1165
      %1167 = vrot.lane.b32.xlu0 %v1135, 16
      %v1168 = vpop.permute.xlu0 %1167
      %1169 = vrot.lane.b32.xlu0 %v1134, 16
      %v1170 = vpop.permute.xlu0 %1169
      %1171 = vrot.lane.b32.xlu0 %v1136, 16
      %v1172 = vpop.permute.xlu0 %1171
      %v1173 = vsel %vm425, %v1166, %v1170
      %v1174 = vsel %vm425, %v1168, %v1172
      %v1175 = vsel %vm425, %v1170, %v1166
      %v1176 = vsel %vm425, %v1172, %v1168
      %v1177 = vld [vmem:[%s430] ss:$8 sm:$0x3]
      %v1179 = vlaneseq
      %v1180 = vshrl.u32 %v1179, 7
      %v1181 = vsub.s32 0, %v1180
      %v1182 = vrot.slane %v1177, %v1181
      %v1183 = vlaneseq
      %v1184 = vshrl.u32 %v1183, 7
      %v1185 = vsub.s32 1, %v1184
      %v1186 = vrot.slane %v1177, %v1185
      %v1189 = vmul.f32 %v1175, %v1182
      %v1190 = vmul.f32 %v1173, %v1186
      %v1191 = vmul.f32 %v1176, %v1182
      %v1192 = vmul.f32 %v1174, %v1186
      %1193 = vrot.lane.b32.xlu0 %v1133, 15
      %v1194 = vpop.permute.xlu0 %1193
      %1195 = vrot.lane.b32.xlu0 %v1135, 15
      %v1196 = vpop.permute.xlu0 %1195
      %1197 = vrot.lane.b32.xlu0 %v1134, 15
      %v1198 = vpop.permute.xlu0 %1197
      %1199 = vrot.lane.b32.xlu0 %v1136, 15
      %v1200 = vpop.permute.xlu0 %1199
      %v1201 = vsel %vm455, %v1194, %v1198
      %v1202 = vsel %vm455, %v1196, %v1200
      %v1203 = vsel %vm455, %v1198, %v1194
      %v1204 = vsel %vm455, %v1200, %v1196
      %v1205 = vld [vmem:[%s460] ss:$8 sm:$0x3]
      %v1207 = vlaneseq
      %v1208 = vshrl.u32 %v1207, 7
      %v1209 = vsub.s32 0, %v1208
      %v1210 = vrot.slane %v1205, %v1209
      %v1211 = vlaneseq
      %v1212 = vshrl.u32 %v1211, 7
      %v1213 = vsub.s32 1, %v1212
      %v1214 = vrot.slane %v1205, %v1213
      %v1217 = vmul.f32 %v1203, %v1210
      %v1218 = vmul.f32 %v1201, %v1214
      %v1219 = vmul.f32 %v1204, %v1210
      %v1220 = vmul.f32 %v1202, %v1214
      %1221 = vrot.lane.b32.xlu0 %v1133, 1
      %v1222 = vpop.permute.xlu0 %1221
      %1223 = vrot.lane.b32.xlu0 %v1135, 1
      %v1224 = vpop.permute.xlu0 %1223
      %1225 = vrot.lane.b32.xlu0 %v1134, 1
      %v1226 = vpop.permute.xlu0 %1225
      %1227 = vrot.lane.b32.xlu0 %v1136, 1
      %v1228 = vpop.permute.xlu0 %1227
      %v1229 = vsel %vm485, %v1222, %v1226
      %v1230 = vsel %vm485, %v1224, %v1228
      %v1231 = vsel %vm485, %v1226, %v1222
      %v1232 = vsel %vm485, %v1228, %v1224
      %v1233 = vld [vmem:[%s490] ss:$8 sm:$0x3]
      %v1235 = vlaneseq
      %v1236 = vshrl.u32 %v1235, 7
      %v1237 = vsub.s32 0, %v1236
      %v1238 = vrot.slane %v1233, %v1237
      %v1239 = vlaneseq
      %v1240 = vshrl.u32 %v1239, 7
      %v1241 = vsub.s32 1, %v1240
      %v1242 = vrot.slane %v1233, %v1241
      %v1245 = vmul.f32 %v1231, %v1238
      %v1246 = vmul.f32 %v1229, %v1242
      %v1247 = vmul.f32 %v1232, %v1238
      %v1248 = vmul.f32 %v1230, %v1242
      %v1249 = vld [vmem:[%s507] ss:$8 sm:$0x3]
      %v1251 = vlaneseq
      %v1252 = vshrl.u32 %v1251, 7
      %v1253 = vsub.s32 0, %v1252
      %v1254 = vrot.slane %v1249, %v1253
      %v1255 = vlaneseq
      %v1256 = vshrl.u32 %v1255, 7
      %v1257 = vsub.s32 1, %v1256
      %v1258 = vrot.slane %v1249, %v1257
      %v1261 = vmul.f32 %v1133, %v1254
      %v1262 = vmul.f32 %v1134, %v1258
      %v1263 = vmul.f32 %v1135, %v1254
      %v1264 = vmul.f32 %v1136, %v1258
      %1265 = vrot.lane.b32.xlu0 %v1133, 127
      %v1266 = vpop.permute.xlu0 %1265
      %1267 = vrot.lane.b32.xlu0 %v1135, 127
      %v1268 = vpop.permute.xlu0 %1267
      %1269 = vrot.lane.b32.xlu0 %v1134, 127
      %v1270 = vpop.permute.xlu0 %1269
      %1271 = vrot.lane.b32.xlu0 %v1136, 127
      %v1272 = vpop.permute.xlu0 %1271
      %v1273 = vsel %vm532, %v1266, %v1270
      %v1274 = vsel %vm532, %v1268, %v1272
      %v1275 = vsel %vm532, %v1270, %v1266
      %v1276 = vsel %vm532, %v1272, %v1268
      %v1277 = vld [vmem:[%s537] ss:$8 sm:$0x3]
      %v1279 = vlaneseq
      %v1280 = vshrl.u32 %v1279, 7
      %v1281 = vsub.s32 0, %v1280
      %v1282 = vrot.slane %v1277, %v1281
      %v1283 = vlaneseq
      %v1284 = vshrl.u32 %v1283, 7
      %v1285 = vsub.s32 1, %v1284
      %v1286 = vrot.slane %v1277, %v1285
      %v1289 = vmul.f32 %v1273, %v1282
      %v1290 = vmul.f32 %v1275, %v1286
      %v1291 = vmul.f32 %v1274, %v1282
      %v1292 = vmul.f32 %v1276, %v1286
      %1293 = vrot.lane.b32.xlu0 %v1133, 113
      %v1294 = vpop.permute.xlu0 %1293
      %1295 = vrot.lane.b32.xlu0 %v1135, 113
      %v1296 = vpop.permute.xlu0 %1295
      %1297 = vrot.lane.b32.xlu0 %v1134, 113
      %v1298 = vpop.permute.xlu0 %1297
      %1299 = vrot.lane.b32.xlu0 %v1136, 113
      %v1300 = vpop.permute.xlu0 %1299
      %v1301 = vsel %vm562, %v1294, %v1298
      %v1302 = vsel %vm562, %v1296, %v1300
      %v1303 = vsel %vm562, %v1298, %v1294
      %v1304 = vsel %vm562, %v1300, %v1296
      %v1305 = vld [vmem:[%s567] ss:$8 sm:$0x3]
      %v1307 = vlaneseq
      %v1308 = vshrl.u32 %v1307, 7
      %v1309 = vsub.s32 0, %v1308
      %v1310 = vrot.slane %v1305, %v1309
      %v1311 = vlaneseq
      %v1312 = vshrl.u32 %v1311, 7
      %v1313 = vsub.s32 1, %v1312
      %v1314 = vrot.slane %v1305, %v1313
      %v1317 = vmul.f32 %v1301, %v1310
      %v1318 = vmul.f32 %v1303, %v1314
      %v1319 = vmul.f32 %v1302, %v1310
      %v1320 = vmul.f32 %v1304, %v1314
      %1321 = vrot.lane.b32.xlu0 %v1133, 112
      %v1322 = vpop.permute.xlu0 %1321
      %1323 = vrot.lane.b32.xlu0 %v1135, 112
      %v1324 = vpop.permute.xlu0 %1323
      %1325 = vrot.lane.b32.xlu0 %v1134, 112
      %v1326 = vpop.permute.xlu0 %1325
      %1327 = vrot.lane.b32.xlu0 %v1136, 112
      %v1328 = vpop.permute.xlu0 %1327
      %v1329 = vsel %vm592, %v1322, %v1326
      %v1330 = vsel %vm592, %v1324, %v1328
      %v1331 = vsel %vm592, %v1326, %v1322
      %v1332 = vsel %vm592, %v1328, %v1324
      %v1333 = vld [vmem:[%s597] ss:$8 sm:$0x3]
      %v1335 = vlaneseq
      %v1336 = vshrl.u32 %v1335, 7
      %v1337 = vsub.s32 0, %v1336
      %v1338 = vrot.slane %v1333, %v1337
      %v1339 = vlaneseq
      %v1340 = vshrl.u32 %v1339, 7
      %v1341 = vsub.s32 1, %v1340
      %v1342 = vrot.slane %v1333, %v1341
      %v1345 = vmul.f32 %v1329, %v1338
      %v1346 = vmul.f32 %v1331, %v1342
      %v1347 = vmul.f32 %v1330, %v1338
      %v1348 = vmul.f32 %v1332, %v1342
      %1349 = vrot.lane.b32.xlu0 %v1133, 111
      %v1350 = vpop.permute.xlu0 %1349
      %1351 = vrot.lane.b32.xlu0 %v1135, 111
      %v1352 = vpop.permute.xlu0 %1351
      %1353 = vrot.lane.b32.xlu0 %v1134, 111
      %v1354 = vpop.permute.xlu0 %1353
      %1355 = vrot.lane.b32.xlu0 %v1136, 111
      %v1356 = vpop.permute.xlu0 %1355
      %v1357 = vsel %vm622, %v1350, %v1354
      %v1358 = vsel %vm622, %v1352, %v1356
      %v1359 = vsel %vm622, %v1354, %v1350
      %v1360 = vsel %vm622, %v1356, %v1352
      %v1361 = vld [vmem:[%s627] ss:$8 sm:$0x3]
      %v1363 = vlaneseq
      %v1364 = vshrl.u32 %v1363, 7
      %v1365 = vsub.s32 0, %v1364
      %v1366 = vrot.slane %v1361, %v1365
      %v1367 = vlaneseq
      %v1368 = vshrl.u32 %v1367, 7
      %v1369 = vsub.s32 1, %v1368
      %v1370 = vrot.slane %v1361, %v1369
      %v1373 = vmul.f32 %v1357, %v1366
      %v1374 = vmul.f32 %v1359, %v1370
      %v1375 = vmul.f32 %v1358, %v1366
      %v1376 = vmul.f32 %v1360, %v1370
      %v1377 = vld [vmem:[%s3] sm:$0xff]
      %v1378 = vld [vmem:[%s3 + $0x8] sm:$0xff]
      %v1379 = vld [vmem:[%s3 + $0x10] sm:$0xff]
      %v1380 = vld [vmem:[%s3 + $0x18] sm:$0xff]
      %v1381 = vld [vmem:[%s3 + $0x20] sm:$0xff]
      %v1382 = vld [vmem:[%s3 + $0x28] sm:$0xff]
      %v1383 = vld [vmem:[%s3 + $0x30] sm:$0xff]
      %v1384 = vld [vmem:[%s3 + $0x38] sm:$0xff]
      %v1385 = vld [vmem:[%s3 + $0x40] sm:$0xff]
      %v1386 = vld [vmem:[%s3 + $0x48] sm:$0xff]
      %v1388 = vsel %vm654, %v1378, 0
      %v1391 = vsel %vm654, %v1380, 0
      %v1394 = vsel %vm654, %v1382, 0
      %v1397 = vsel %vm654, %v1384, 0
      %v1400 = vsel %vm654, %v1386, 0
      %1402 = vmatprep.subr.mxu0 %v1162
      %1403 = vmatpush1.msra.mxu0 %v1161
      %1404 = vmatprep.subr.mxu0 %v1164
      %1405 = vmatpush1.msra.mxu0 %v1163
      %1406 = vmatprep.subr.mxu0 %v1190
      %1407 = vmatpush1.msra.mxu0 %v1189
      %1408 = vmatprep.subr.mxu0 %v1192
      %1409 = vmatpush1.msra.mxu0 %v1191
      %1410 = vmatprep.subr.mxu0 %v1218
      %1411 = vmatpush1.msra.mxu0 %v1217
      %1412 = vmatprep.subr.mxu0 %v1220
      %1413 = vmatpush1.msra.mxu0 %v1219
      %1414 = vmatprep.subr.mxu0 %v1246
      %1415 = vmatpush1.msra.mxu0 %v1245
      %1416 = vmatprep.subr.mxu0 %v1248
      %1417 = vmatpush1.msra.mxu0 %v1247
      %1418 = vmatprep.subr.mxu0 %v1262
      %1419 = vmatpush1.msra.mxu0 %v1261
      %1420 = vmatprep.subr.mxu0 %v1264
      %1421 = vmatpush1.msra.mxu0 %v1263
      %1422 = vmatprep.subr.mxu0 %v1290
      %1423 = vmatpush1.msra.mxu0 %v1289
      %1424 = vmatprep.subr.mxu0 %v1292
      %1425 = vmatpush1.msra.mxu0 %v1291
      %1426 = vmatprep.subr.mxu0 %v1318
      %1427 = vmatpush1.msra.mxu0 %v1317
      %1428 = vmatprep.subr.mxu0 %v1320
      %1429 = vmatpush1.msra.mxu0 %v1319
      %1430 = vmatprep.subr.mxu0 %v1346
      %1431 = vmatpush1.msra.mxu0 %v1345
      %1432 = vmatprep.subr.mxu0 %v1348
      %1433 = vmatpush1.msra.mxu0 %v1347
      %1434 = vmatprep.subr.mxu0 %v1374
      %1435 = vmatpush1.msra.mxu0 %v1373
      %1436 = vmatprep.subr.mxu0 %v1376
      %1437 = vmatpush1.msra.mxu0 %v1375
      %1438 = vmatprep.subr.mxu0 0.0
      %1439 = vmatpush1.msra.mxu0 0.0
      %1440 = vmatprep.subr.mxu0 0.0
      %1441 = vmatpush1.msra.mxu0 0.0
      %1442 = vmatprep.subr.mxu0 0.0
      %1443 = vmatpush1.msra.mxu0 0.0
      %1444 = vmatprep.subr.mxu0 0.0
      %1445 = vmatpush1.msra.mxu0 0.0
      %1446 = vmatprep.subr.mxu0 0.0
      %1447 = vmatpush1.msra.mxu0 0.0
      %1448 = vmatprep.subr.mxu0 0.0
      %1449 = vmatpush1.msra.mxu0 0.0
      %1450 = vmatprep.subr.mxu0 0.0
      %1451 = vmatpush1.msra.mxu0 0.0
      %1452 = vmatprep.subr.mxu0 0.0
      %1453 = vmatpush1.msra.mxu0 0.0
      %1454 = vmatprep.subr.mxu0 0.0
      %1455 = vmatpush1.msra.mxu0 0.0
      %1456 = vmatprep.subr.mxu0 0.0
      %1457 = vmatpush1.msra.mxu0 0.0
      %1458 = vmatprep.subr.mxu0 0.0
      %1459 = vmatpush1.msra.mxu0 0.0
      %1460 = vmatprep.subr.mxu0 0.0
      %1461 = vmatpush1.msra.mxu0 0.0
      %1462 = vmatprep.subr.mxu0 0.0
      %1463 = vmatpush1.msra.mxu0 0.0
      %1464 = vmatprep.subr.mxu0 0.0
      %1465 = vmatpush1.msra.mxu0 0.0
      %1466 = vmatprep.mubr.f32.mxu0 %v1388
      %1467 = vmatmul.mubr.f32.gmra.mrb[0].mxu0 %v1377
      %v1468 = vpop.f32.mrb[0].mxu0
      %v1469 = vadd.f32 0.0, %v1468
      %v1470 = vpop.f32.mrb[0].mxu0
      %v1471 = vadd.f32 0.0, %v1470
      %1472 = vmatprep.mubr.f32.mxu0 %v1391
      %1473 = vmatmul.mubr.f32.gmra.mrb[0].mxu0 %v1379
      %v1474 = vpop.f32.mrb[0].mxu0
      %v1475 = vadd.f32 0.0, %v1474
      %v1476 = vpop.f32.mrb[0].mxu0
      %v1477 = vadd.f32 0.0, %v1476
      %1478 = vmatprep.mubr.f32.mxu0 %v1394
      %1479 = vmatmul.mubr.f32.gmra.mrb[0].mxu0 %v1381
      %v1480 = vpop.f32.mrb[0].mxu0
      %v1481 = vadd.f32 0.0, %v1480
      %v1482 = vpop.f32.mrb[0].mxu0
      %v1483 = vadd.f32 0.0, %v1482
      %1484 = vmatprep.mubr.f32.mxu0 %v1397
      %1485 = vmatmul.mubr.f32.gmra.mrb[0].mxu0 %v1383
      %v1486 = vpop.f32.mrb[0].mxu0
      %v1487 = vadd.f32 0.0, %v1486
      %v1488 = vpop.f32.mrb[0].mxu0
      %v1489 = vadd.f32 0.0, %v1488
      %1490 = vmatprep.mubr.f32.mxu0 %v1400
      %1491 = vmatmul.mubr.f32.gmra.mrb[0].mxu0 %v1385
      %v1492 = vpop.f32.mrb[0].mxu0
      %v1493 = vadd.f32 0.0, %v1492
      %v1494 = vpop.f32.mrb[0].mxu0
      %v1495 = vadd.f32 0.0, %v1494
      %1496 = vdwg.mxu0
      %v1497 = vld [vmem:[%s4] sm:$0xff]
      %1499 = vset.pattern.permute.xlu0 0
      %1500 = vperm.xlu0 %1499, %v1497
      %v1501 = vpop.permute.xlu0 %1500
      %v1503 = vadd.f32 %v1469, %v1501
      %v1504 = vadd.f32 %v1471, %v1501
      %v1505 = vtanh.pop %v1503
      %v1506 = vtanh.pop %v1504
      %v1507 = vld [vmem:[%s5] sm:$0xff]
      %1509 = vset.pattern.permute.xlu0 0
      %1510 = vperm.xlu0 %1509, %v1507
      %v1511 = vpop.permute.xlu0 %1510
      %v1513 = vmul.f32 %v1505, %v1511
      %v1514 = vmul.f32 %v1506, %v1511
      %v1515 = vrot.slane %v1513, 4
      %v1516 = vadd.f32 %v1513, %v1515
      %v1517 = vrot.slane %v1516, 2
      %v1518 = vadd.f32 %v1516, %v1517
      %v1519 = vrot.slane %v1518, 1
      %v1520 = vadd.f32 %v1518, %v1519
      %v1521 = vrot.slane %v1514, 4
      %v1522 = vadd.f32 %v1514, %v1521
      %v1523 = vrot.slane %v1522, 2
      %v1524 = vadd.f32 %v1522, %v1523
      %v1525 = vrot.slane %v1524, 1
      %v1526 = vadd.f32 %v1524, %v1525
      %v1527 = vmax.f32 %v1520, %v1526
      %1528 = vmax.xlane.f32.xlu0 %v1527
      %v1529 = vpop.xlane.xlu0 %1528
      %v1530 = vsub.f32 %v1520, %v1529
      %v1531 = vsub.f32 %v1526, %v1529
      %v1532 = vmul.f32 %v1530, 1.442695
      %v1533 = vpow.pop %v1532
      %v1534 = vmul.f32 %v1531, 1.442695
      %v1535 = vpow.pop %v1534
      %v1536 = vadd.f32 %v1533, %v1535
      %1537 = vadd.xlane.f32.xlu0 %v1536
      %v1538 = vpop.xlane.xlu0 %1537
      %v1539 = vrcp.pop %v1538
      %v1540 = vmul.f32 %v1533, %v1539
      %v1541 = vmul.f32 %v1535, %v1539
      %1542 = vrot.lane.b32.xlu0 %v1540, 17
      %v1543 = vpop.permute.xlu0 %1542
      %1544 = vrot.lane.b32.xlu0 %v1541, 17
      %v1545 = vpop.permute.xlu0 %1544
      %v1546 = vsel %vm396, %v1543, %v1545
      %v1547 = vsel %vm396, %v1545, %v1543
      %v1548 = vlaneseq
      %v1549 = vshrl.u32 %v1548, 7
      %v1550 = vsub.s32 0, %v1549
      %v1551 = vrot.slane %v1547, %v1550
      %v1552 = vlaneseq
      %v1553 = vshrl.u32 %v1552, 7
      %v1554 = vsub.s32 0, %v1553
      %v1555 = vrot.slane %v1546, %v1554
      %v1556 = vmul.f32 %v1551, %v1161
      %v1557 = vmul.f32 %v1555, %v1162
      %1558 = vrot.lane.b32.xlu0 %v1540, 16
      %v1559 = vpop.permute.xlu0 %1558
      %1560 = vrot.lane.b32.xlu0 %v1541, 16
      %v1561 = vpop.permute.xlu0 %1560
      %v1562 = vsel %vm425, %v1559, %v1561
      %v1563 = vsel %vm425, %v1561, %v1559
      %v1564 = vlaneseq
      %v1565 = vshrl.u32 %v1564, 7
      %v1566 = vsub.s32 0, %v1565
      %v1567 = vrot.slane %v1563, %v1566
      %v1568 = vlaneseq
      %v1569 = vshrl.u32 %v1568, 7
      %v1570 = vsub.s32 0, %v1569
      %v1571 = vrot.slane %v1562, %v1570
      %v1572 = vmul.f32 %v1567, %v1189
      %v1573 = vmul.f32 %v1571, %v1190
      %1574 = vrot.lane.b32.xlu0 %v1540, 15
      %v1575 = vpop.permute.xlu0 %1574
      %1576 = vrot.lane.b32.xlu0 %v1541, 15
      %v1577 = vpop.permute.xlu0 %1576
      %v1578 = vsel %vm455, %v1575, %v1577
      %v1579 = vsel %vm455, %v1577, %v1575
      %v1580 = vlaneseq
      %v1581 = vshrl.u32 %v1580, 7
      %v1582 = vsub.s32 0, %v1581
      %v1583 = vrot.slane %v1579, %v1582
      %v1584 = vlaneseq
      %v1585 = vshrl.u32 %v1584, 7
      %v1586 = vsub.s32 0, %v1585
      %v1587 = vrot.slane %v1578, %v1586
      %v1588 = vmul.f32 %v1583, %v1217
      %v1589 = vmul.f32 %v1587, %v1218
      %1590 = vrot.lane.b32.xlu0 %v1540, 1
      %v1591 = vpop.permute.xlu0 %1590
      %1592 = vrot.lane.b32.xlu0 %v1541, 1
      %v1593 = vpop.permute.xlu0 %1592
      %v1594 = vsel %vm485, %v1591, %v1593
      %v1595 = vsel %vm485, %v1593, %v1591
      %v1596 = vlaneseq
      %v1597 = vshrl.u32 %v1596, 7
      %v1598 = vsub.s32 0, %v1597
      %v1599 = vrot.slane %v1595, %v1598
      %v1600 = vlaneseq
      %v1601 = vshrl.u32 %v1600, 7
      %v1602 = vsub.s32 0, %v1601
      %v1603 = vrot.slane %v1594, %v1602
      %v1604 = vmul.f32 %v1599, %v1245
      %v1605 = vmul.f32 %v1603, %v1246
      %v1606 = vmul.f32 %v1540, %v1261
      %v1607 = vmul.f32 %v1541, %v1262
      %1608 = vrot.lane.b32.xlu0 %v1540, 127
      %v1609 = vpop.permute.xlu0 %1608
      %1610 = vrot.lane.b32.xlu0 %v1541, 127
      %v1611 = vpop.permute.xlu0 %1610
      %v1612 = vsel %vm532, %v1609, %v1611
      %v1613 = vsel %vm532, %v1611, %v1609
      %v1614 = vlaneseq
      %v1615 = vshrl.u32 %v1614, 7
      %v1616 = vsub.s32 0, %v1615
      %v1617 = vrot.slane %v1612, %v1616
      %v1618 = vlaneseq
      %v1619 = vshrl.u32 %v1618, 7
      %v1620 = vsub.s32 0, %v1619
      %v1621 = vrot.slane %v1613, %v1620
      %v1622 = vmul.f32 %v1617, %v1289
      %v1623 = vmul.f32 %v1621, %v1290
      %1624 = vrot.lane.b32.xlu0 %v1540, 113
      %v1625 = vpop.permute.xlu0 %1624
      %1626 = vrot.lane.b32.xlu0 %v1541, 113
      %v1627 = vpop.permute.xlu0 %1626
      %v1628 = vsel %vm562, %v1625, %v1627
      %v1629 = vsel %vm562, %v1627, %v1625
      %v1630 = vlaneseq
      %v1631 = vshrl.u32 %v1630, 7
      %v1632 = vsub.s32 0, %v1631
      %v1633 = vrot.slane %v1628, %v1632
      %v1634 = vlaneseq
      %v1635 = vshrl.u32 %v1634, 7
      %v1636 = vsub.s32 0, %v1635
      %v1637 = vrot.slane %v1629, %v1636
      %v1638 = vmul.f32 %v1633, %v1317
      %v1639 = vmul.f32 %v1637, %v1318
      %1640 = vrot.lane.b32.xlu0 %v1540, 112
      %v1641 = vpop.permute.xlu0 %1640
      %1642 = vrot.lane.b32.xlu0 %v1541, 112
      %v1643 = vpop.permute.xlu0 %1642
      %v1644 = vsel %vm592, %v1641, %v1643
      %v1645 = vsel %vm592, %v1643, %v1641
      %v1646 = vlaneseq
      %v1647 = vshrl.u32 %v1646, 7
      %v1648 = vsub.s32 0, %v1647
      %v1649 = vrot.slane %v1644, %v1648
      %v1650 = vlaneseq
      %v1651 = vshrl.u32 %v1650, 7
      %v1652 = vsub.s32 0, %v1651
      %v1653 = vrot.slane %v1645, %v1652
      %v1654 = vmul.f32 %v1649, %v1345
      %v1655 = vmul.f32 %v1653, %v1346
      %1656 = vrot.lane.b32.xlu0 %v1540, 111
      %v1657 = vpop.permute.xlu0 %1656
      %1658 = vrot.lane.b32.xlu0 %v1541, 111
      %v1659 = vpop.permute.xlu0 %1658
      %v1660 = vsel %vm622, %v1657, %v1659
      %v1661 = vsel %vm622, %v1659, %v1657
      %v1662 = vlaneseq
      %v1663 = vshrl.u32 %v1662, 7
      %v1664 = vsub.s32 0, %v1663
      %v1665 = vrot.slane %v1660, %v1664
      %v1666 = vlaneseq
      %v1667 = vshrl.u32 %v1666, 7
      %v1668 = vsub.s32 0, %v1667
      %v1669 = vrot.slane %v1661, %v1668
      %v1670 = vmul.f32 %v1665, %v1373
      %v1671 = vmul.f32 %v1669, %v1374
      %v1672 = vld [vmem:[%s6] sm:$0xff]
      %v1673 = vld [vmem:[%s6 + $0x8] sm:$0xff]
      %v1674 = vld [vmem:[%s6 + $0x10] sm:$0xff]
      %v1675 = vld [vmem:[%s6 + $0x18] sm:$0xff]
      %v1677 = vsel %vm944, %v1672, 0
      %v1680 = vsel %vm944, %v1673, 0
      %v1683 = vsel %vm944, %v1674, 0
      %v1686 = vsel %vm944, %v1675, 0
      %1688 = vmatprep.subr.mxu0 %v1557
      %1689 = vmatpush1.msra.mxu0 %v1556
      %1690 = vmatprep.subr.mxu0 %v1573
      %1691 = vmatpush1.msra.mxu0 %v1572
      %1692 = vmatprep.subr.mxu0 %v1589
      %1693 = vmatpush1.msra.mxu0 %v1588
      %1694 = vmatprep.subr.mxu0 %v1605
      %1695 = vmatpush1.msra.mxu0 %v1604
      %1696 = vmatprep.subr.mxu0 %v1607
      %1697 = vmatpush1.msra.mxu0 %v1606
      %1698 = vmatprep.subr.mxu0 %v1623
      %1699 = vmatpush1.msra.mxu0 %v1622
      %1700 = vmatprep.subr.mxu0 %v1639
      %1701 = vmatpush1.msra.mxu0 %v1638
      %1702 = vmatprep.subr.mxu0 %v1655
      %1703 = vmatpush1.msra.mxu0 %v1654
      %1704 = vmatprep.subr.mxu0 %v1671
      %1705 = vmatpush1.msra.mxu0 %v1670
      %1706 = vmatprep.subr.mxu0 0.0
      %1707 = vmatpush1.msra.mxu0 0.0
      %1708 = vmatprep.subr.mxu0 0.0
      %1709 = vmatpush1.msra.mxu0 0.0
      %1710 = vmatprep.subr.mxu0 0.0
      %1711 = vmatpush1.msra.mxu0 0.0
      %1712 = vmatprep.subr.mxu0 0.0
      %1713 = vmatpush1.msra.mxu0 0.0
      %1714 = vmatprep.subr.mxu0 0.0
      %1715 = vmatpush1.msra.mxu0 0.0
      %1716 = vmatprep.subr.mxu0 0.0
      %1717 = vmatpush1.msra.mxu0 0.0
      %1718 = vmatprep.subr.mxu0 0.0
      %1719 = vmatpush1.msra.mxu0 0.0
      %1720 = vmatprep.subr.mxu0 0.0
      %1721 = vmatpush1.msra.mxu0 0.0
      %1722 = vmatprep.subr.mxu0 0.0
      %1723 = vmatpush1.msra.mxu0 0.0
      %1724 = vmatprep.subr.mxu0 0.0
      %1725 = vmatpush1.msra.mxu0 0.0
      %1726 = vmatprep.subr.mxu0 0.0
      %1727 = vmatpush1.msra.mxu0 0.0
      %1728 = vmatprep.subr.mxu0 0.0
      %1729 = vmatpush1.msra.mxu0 0.0
      %1730 = vmatprep.subr.mxu0 0.0
      %1731 = vmatpush1.msra.mxu0 0.0
      %1732 = vmatprep.subr.mxu0 0.0
      %1733 = vmatpush1.msra.mxu0 0.0
      %1734 = vmatprep.subr.mxu0 0.0
      %1735 = vmatpush1.msra.mxu0 0.0
      %1736 = vmatprep.subr.mxu0 0.0
      %1737 = vmatpush1.msra.mxu0 0.0
      %1738 = vmatprep.subr.mxu0 0.0
      %1739 = vmatpush1.msra.mxu0 0.0
      %1740 = vmatprep.subr.mxu0 0.0
      %1741 = vmatpush1.msra.mxu0 0.0
      %1742 = vmatprep.subr.mxu0 0.0
      %1743 = vmatpush1.msra.mxu0 0.0
      %1744 = vmatprep.subr.mxu0 0.0
      %1745 = vmatpush1.msra.mxu0 0.0
      %1746 = vmatprep.subr.mxu0 0.0
      %1747 = vmatpush1.msra.mxu0 0.0
      %1748 = vmatprep.subr.mxu0 0.0
      %1749 = vmatpush1.msra.mxu0 0.0
      %1750 = vmatprep.subr.mxu0 0.0
      %1751 = vmatpush1.msra.mxu0 0.0
      %1752 = vmatprep.mubr.f32.mxu0 0.0
      %1753 = vmatmul.mubr.f32.gmra.mrb[0].mxu0 %v1677
      %v1754 = vpop.f32.mrb[0].mxu0
      %v1755 = vadd.f32 %v1475, %v1754
      %v1756 = vpop.f32.mrb[0].mxu0
      %v1757 = vadd.f32 %v1477, %v1756
      %1758 = vmatprep.mubr.f32.mxu0 0.0
      %1759 = vmatmul.mubr.f32.gmra.mrb[0].mxu0 %v1680
      %v1760 = vpop.f32.mrb[0].mxu0
      %v1761 = vadd.f32 %v1481, %v1760
      %v1762 = vpop.f32.mrb[0].mxu0
      %v1763 = vadd.f32 %v1483, %v1762
      %1764 = vmatprep.mubr.f32.mxu0 0.0
      %1765 = vmatmul.mubr.f32.gmra.mrb[0].mxu0 %v1683
      %v1766 = vpop.f32.mrb[0].mxu0
      %v1767 = vadd.f32 %v1487, %v1766
      %v1768 = vpop.f32.mrb[0].mxu0
      %v1769 = vadd.f32 %v1489, %v1768
      %1770 = vmatprep.mubr.f32.mxu0 0.0
      %1771 = vmatmul.mubr.f32.gmra.mrb[0].mxu0 %v1686
      %v1772 = vpop.f32.mrb[0].mxu0
      %v1773 = vadd.f32 %v1493, %v1772
      %v1774 = vpop.f32.mrb[0].mxu0
      %v1775 = vadd.f32 %v1495, %v1774
      %1776 = vdwg.mxu0
      %v1777 = vld [vmem:[%s7] sm:$0xff]
      %v1778 = vld [vmem:[%s7 + $0x8] sm:$0xff]
      %v1779 = vld [vmem:[%s7 + $0x10] sm:$0xff]
      %v1780 = vld [vmem:[%s7 + $0x18] sm:$0xff]
      %1782 = vset.pattern.permute.xlu0 0
      %1783 = vperm.xlu0 %1782, %v1777
      %v1784 = vpop.permute.xlu0 %1783
      %1787 = vset.pattern.permute.xlu0 0
      %1788 = vperm.xlu0 %1787, %v1778
      %v1789 = vpop.permute.xlu0 %1788
      %1792 = vset.pattern.permute.xlu0 0
      %1793 = vperm.xlu0 %1792, %v1779
      %v1794 = vpop.permute.xlu0 %1793
      %1797 = vset.pattern.permute.xlu0 0
      %1798 = vperm.xlu0 %1797, %v1780
      %v1799 = vpop.permute.xlu0 %1798
      %v1801 = vadd.f32 %v1755, %v1784
      %v1802 = vadd.f32 %v1757, %v1784
      %v1803 = vadd.f32 %v1761, %v1789
      %v1804 = vadd.f32 %v1763, %v1789
      %v1805 = vadd.f32 %v1767, %v1794
      %v1806 = vadd.f32 %v1769, %v1794
      %v1807 = vadd.f32 %v1773, %v1799
      %v1808 = vadd.f32 %v1775, %v1799
      %v1809 = vxor.u32 %v1801, 2147483648
      %v1810 = vxor.u32 %v1802, 2147483648
      %v1811 = vmul.f32 %v1809, 1.442695
      %v1812 = vpow.pop %v1811
      %v1813 = vmul.f32 %v1810, 1.442695
      %v1814 = vpow.pop %v1813
      %v1815 = vadd.f32 %v1812, 1.0
      %v1816 = vadd.f32 %v1814, 1.0
      %v1817 = vrcp.pop %v1815
      %v1818 = vmul.f32 1.0, %v1817
      %v1819 = vrcp.pop %v1816
      %v1820 = vmul.f32 1.0, %v1819
      %v1821 = vxor.u32 %v1803, 2147483648
      %v1822 = vxor.u32 %v1804, 2147483648
      %v1823 = vmul.f32 %v1821, 1.442695
      %v1824 = vpow.pop %v1823
      %v1825 = vmul.f32 %v1822, 1.442695
      %v1826 = vpow.pop %v1825
      %v1827 = vadd.f32 %v1824, 1.0
      %v1828 = vadd.f32 %v1826, 1.0
      %v1829 = vrcp.pop %v1827
      %v1830 = vmul.f32 1.0, %v1829
      %v1831 = vrcp.pop %v1828
      %v1832 = vmul.f32 1.0, %v1831
      %v1833 = vxor.u32 %v1805, 2147483648
      %v1834 = vxor.u32 %v1806, 2147483648
      %v1835 = vmul.f32 %v1833, 1.442695
      %v1836 = vpow.pop %v1835
      %v1837 = vmul.f32 %v1834, 1.442695
      %v1838 = vpow.pop %v1837
      %v1839 = vadd.f32 %v1836, 1.0
      %v1840 = vadd.f32 %v1838, 1.0
      %v1841 = vrcp.pop %v1839
      %v1842 = vmul.f32 1.0, %v1841
      %v1843 = vrcp.pop %v1840
      %v1844 = vmul.f32 1.0, %v1843
      %v1845 = vtanh.pop %v1807
      %v1846 = vtanh.pop %v1808
      %s1847 = scalar_lea.vmem %s366, 16
      %v1848 = vld [vmem:[%s1847] sm:$0xff]
      %v1849 = vld [vmem:[%s1847 + $0x8] sm:$0xff]
      %v1850 = vmul.f32 %v1830, %v1848
      %v1851 = vmul.f32 %v1832, %v1849
      %v1852 = vmul.f32 %v1818, %v1845
      %v1853 = vmul.f32 %v1820, %v1846
      %v1854 = vadd.f32 %v1850, %v1852
      %v1855 = vadd.f32 %v1851, %v1853
      %v1856 = vtanh.pop %v1854
      %v1857 = vtanh.pop %v1855
      %v1858 = vmul.f32 %v1842, %v1856
      %v1859 = vmul.f32 %v1844, %v1857
      %s1860 = scalar_lea.vmem %s373, 16
      %1861 = vst [vmem:[%s1860] sm:$0xff] %v1858
      %1862 = vst [vmem:[%s1860 + $0x8] sm:$0xff] %v1859
      %s1863 = scalar_lea.vmem %s380, 16
      %1864 = vst [vmem:[%s1863] sm:$0xff] %v1854
      %1865 = vst [vmem:[%s1863 + $0x8] sm:$0xff] %v1855
      %s1866 = smul.u32 2, %s21
      %p1867 = scmp.lt.s32.totalorder %s1866, 3
      %s1868 = scalar_select %p1867, %s1866, 3
      %s1869 = smul.addr %s1868, 2
      %s1870 = smul.addr %s1869, 8
      %s1871 = scalar_lea.vmem %s8, %s1870
      %s1872 = smul.u32 2, %s21
      %p1873 = scmp.lt.s32.totalorder %s1872, 3
      %s1874 = scalar_select %p1873, %s1872, 3
      %s1875 = smul.addr %s1874, 2
      %s1876 = smul.addr %s1875, 8
      %s1877 = scalar_lea.vmem %s9, %s1876
      // Predicated region
      $region53: #{attentive_conv_lstm_cell.1} parent=51 // pred_check
        %p1878 = pneg %p217
      $region54: #{attentive_conv_lstm_cell.1} parent=51 // pred_check_branch
        %1880 = sbr.rel (%p1878) target = $region56
      $region55: #{attentive_conv_lstm_cell.1} parent=51 // pred_region
        %s1881 = smul.u32 2, %s21
      $region56: #{attentive_conv_lstm_cell.1} parent=51 // pred_fallthru
        _
      // Predicated region
      $region57: #{attentive_conv_lstm_cell.1} parent=51 // pred_check
        %p1882 = pneg %p243
      $region58: #{attentive_conv_lstm_cell.1} parent=51 // pred_check_branch
        %1884 = sbr.rel (%p1882) target = $region60
      $region59: #{attentive_conv_lstm_cell.1} parent=51 // pred_region
        %s1885 = smul.u32 2, %s21
      $region60: #{attentive_conv_lstm_cell.1} parent=51 // pred_fallthru
        _
    $region52: #{attentive_conv_lstm_cell.1} parent=5 // pred_fallthru
      _
    %p1886 = scmp.le.s32.totalorder 2, %s16
    // Predicated region
    $region61: #{attentive_conv_lstm_cell.1} parent=5 // pred_check
      %p1887 = pneg %p1886
    $region62: #{attentive_conv_lstm_cell.1} parent=5 // pred_check_branch
      %1889 = sbr.rel (%p1887) target = $region64
    $region63: #{attentive_conv_lstm_cell.1} parent=5 // pred_region
      %s1890 = ssub.s32 %s16, 2
      // Predicated region
      $region65: #{attentive_conv_lstm_cell.1} parent=63 // pred_check
        %p1891 = pneg %p223
      $region66: #{attentive_conv_lstm_cell.1} parent=63 // pred_check_branch
        %1893 = sbr.rel (%p1891) target = $region68
      $region67: #{attentive_conv_lstm_cell.1} parent=63 // pred_region
        %s1894 = smul.u32 2, %s22
        %p1895 = scmp.lt.s32.totalorder %s1894, 3
        %s1896 = scalar_select %p1895, %s1894, 3
        %s1897 = smul.addr %s1896, 2
        %s1898 = smul.addr %s1897, 8
        %s1899 = scalar_lea.vmem %s8, %s1898
      $region68: #{attentive_conv_lstm_cell.1} parent=63 // pred_fallthru
        _
      // Predicated region
      $region69: #{attentive_conv_lstm_cell.1} parent=63 // pred_check
        %p1900 = pneg %p249
      $region70: #{attentive_conv_lstm_cell.1} parent=63 // pred_check_branch
        %1902 = sbr.rel (%p1900) target = $region72
      $region71: #{attentive_conv_lstm_cell.1} parent=63 // pred_region
        %s1903 = smul.u32 2, %s22
        %p1904 = scmp.lt.s32.totalorder %s1903, 3
        %s1905 = scalar_select %p1904, %s1903, 3
        %s1906 = smul.addr %s1905, 2
        %s1907 = smul.addr %s1906, 8
        %s1908 = scalar_lea.vmem %s9, %s1907
      $region72: #{attentive_conv_lstm_cell.1} parent=63 // pred_fallthru
        _
    $region64: #{attentive_conv_lstm_cell.1} parent=5 // pred_fallthru
      _
  $region6: #{attentive_conv_lstm_cell.1} parent=0 // loop_footer
    %s20 = sadd.s32 1, %s16
  $region7: #{attentive_conv_lstm_cell.1} parent=0 // loop_footer_branch
    %15 = sbr.rel target = $region3
  $region8: #{attentive_conv_lstm_cell.1} parent=0 // loop_exit
    _

</llo_original>
